<compile_context>
chip_gen: v7x
topology: tpu7x:2x2x1
jax: 0.10.0
libtpu: 0.0.40
codegen_flags: <defaults>
</compile_context>

<pallas_src>
import jax
import jax.numpy as jnp
from jax.experimental import pallas as pl
from jax.experimental.pallas import tpu as pltpu

BN_EPS = 1e-5
LANE = 128


def make_three_inputs_net(params, B, L_title, L_full):
    """One-time parameter packing + a jitted forward(packed, ids_t, ids_f, x_cat)."""
    f32, bf16 = jnp.float32, jnp.bfloat16

    hid2 = params["w_tc"].shape[0]              # 2 * hid_size
    hid = params["title_emb"].shape[1]          # hid_size
    n_cat = params["w_cat"].shape[1]
    lt = L_title - 2                            # title conv output length
    lf2, lf3 = L_full - 4, L_full - 6           # full conv2 / conv3 output lengths
    BL1, BL2 = B * L_title, B * L_full

    assert B <= 8 and BL1 <= LANE and BL2 <= LANE
    assert hid <= LANE and hid2 <= LANE and n_cat <= LANE
    assert params["w_tc"].shape[2] == 3

    # ------------ one-time packing (hoisted out of the per-call path) ------------
    def conv_w_roll(w):                         # (O, I, 3) -> (3*LANE, LANE)
        wt = jnp.transpose(w.astype(f32), (2, 1, 0))                  # (3, I, O)
        wt = jnp.pad(wt, ((0, 0), (0, LANE - wt.shape[1]), (0, LANE - wt.shape[2])))
        return wt.reshape(3 * LANE, LANE)

    def padmat(m):                              # (r, c) -> (LANE, LANE)
        return jnp.pad(m.astype(f32),
                       ((0, LANE - m.shape[0]), (0, LANE - m.shape[1])))

    # Category Linear is purely linear before the concat -> fold into inter_dense.
    w_inter = params["w_inter"].astype(f32)                           # (2H, 6H)
    w_t_i = w_inter[:, 0 * hid2:1 * hid2].T                           # (2H, 2H)
    w_f_i = w_inter[:, 1 * hid2:2 * hid2].T
    w_c_i = w_inter[:, 2 * hid2:3 * hid2].T
    w_cat_f = params["w_cat"].astype(f32).T @ w_c_i                   # (n_cat, 2H)
    b_int_f = params["b_inter"].astype(f32) + params["b_cat"].astype(f32) @ w_c_i
    w_int_fused = jnp.concatenate(
        [padmat(w_t_i), padmat(w_f_i), padmat(w_cat_f)], axis=0)      # (3*LANE, LANE)

    w_fin_mat = padmat(params["w_final"].astype(f32).T)               # col 0 = w_final

    def pool_sel(L, lout, width):               # (B, width) 0/1 selector rows
        cols = jnp.arange(width)[None, :]
        b = jnp.arange(B)[:, None]
        return ((cols >= b * L) & (cols < b * L + lout)).astype(f32)

    p_t = jnp.pad(pool_sel(L_title, lt, BL1), ((0, 8 - B), (0, LANE - BL1)))
    p_f = jnp.pad(pool_sel(L_full, lf3, BL2), ((0, 8 - B), (0, LANE - BL2)))

    w_blocks = [conv_w_roll(params["w_tc"]),    # title conv1
                conv_w_roll(params["w_fc1"]),   # full conv1
                conv_w_roll(params["w_fc2"]),   # full conv2
                conv_w_roll(params["w_fc3"]),   # full conv3
                w_int_fused,                    # concat + inter_dense (cat folded)
                w_fin_mat,                      # final_dense (lane-dense)
                p_t, p_f]                       # pooling 0/1 selectors
    offs, o = [], 0
    for blk in w_blocks:
        offs.append(o)
        o += blk.shape[0]
    OFF_W1T, OFF_W1F, OFF_W2F, OFF_W3F, OFF_WI, OFF_WF, OFF_PT, OFF_PF = offs
    w_pack = jnp.concatenate(w_blocks, axis=0).astype(bf16)

    def vrow(v):
        v = jnp.atleast_2d(v.astype(f32))
        return jnp.pad(v, ((0, 0), (0, LANE - v.shape[1])))

    # BN mask column: 1/(B*lf2) at valid conv2-output rows, 0 elsewhere.
    pos = jnp.arange(BL2)
    bn_mask = jnp.where((pos % L_full) < lf2, 1.0 / (B * lf2), 0.0).astype(f32)
    bn_mask_blk = jnp.pad(bn_mask[:, None], ((0, 0), (0, LANE - 1)))  # (BL2, LANE)

    v_pack = jnp.concatenate(
        [vrow(params["b_tc"]), vrow(params["b_fc1"]), vrow(params["b_fc2"]),
         vrow(params["bn_g"]), vrow(params["bn_b"]), vrow(params["b_fc3"]),
         vrow(b_int_f),
         jnp.broadcast_to(params["b_final"].astype(f32).reshape(1, 1), (1, LANE)),
         bn_mask_blk], axis=0)                                        # (8+BL2, LANE)

    emb_t = jnp.pad(params["title_emb"].astype(f32), ((0, 0), (0, LANE - hid)))
    emb_f = jnp.pad(params["full_emb"].astype(f32), ((0, 0), (0, LANE - hid)))

    packed = dict(w_pack=w_pack, v_pack=v_pack, emb_t=emb_t, emb_f=emb_f)

    # ---------------------------------- kernel -----------------------------------
    def kernel(act_ref, w_ref, v_ref, out_ref):
        def taps3(x):
            # row i -> [x[i], x[i+1], x[i+2]]; wrap rows are invalid and are
            # masked out downstream (BN mask / pooling selectors).
            n = x.shape[0]
            return jnp.concatenate(
                [x, pltpu.roll(x, n - 1, axis=0), pltpu.roll(x, n - 2, axis=0)],
                axis=-1).astype(bf16)

        def conv_relu(x, w_off, b):             # k=3 conv as ONE K=384 MXU matmul
            y = jnp.dot(taps3(x), w_ref[pl.ds(w_off, 3 * LANE), :],
                        preferred_element_type=f32)
            return jnp.maximum(y + b, 0.0)

        b_tc = v_ref[pl.ds(0, 1), :]
        b_f1 = v_ref[pl.ds(1, 1), :]
        b_f2 = v_ref[pl.ds(2, 1), :]
        bn_g = v_ref[pl.ds(3, 1), :]
        bn_b = v_ref[pl.ds(4, 1), :]
        b_f3 = v_ref[pl.ds(5, 1), :]
        b_int = v_ref[pl.ds(6, 1), :]
        b_fin = v_ref[pl.ds(7, 1), :]
        bn_m = v_ref[pl.ds(8, BL2), pl.ds(0, 1)]          # (BL2, 1), carries 1/count

        x_t = act_ref[pl.ds(0, BL1), :]                   # (BL1, 128) f32
        x_f = act_ref[pl.ds(BL1, BL2), :]                 # (BL2, 128) f32
        x_c = act_ref[pl.ds(BL1 + BL2, B), :]             # (B, 128)   f32

        # ---- title: conv -> relu -> avg-pool (bf16 selector matmul, f32 scale) ----
        r_t = conv_relu(x_t, OFF_W1T, b_tc)
        p_t_ = w_ref[pl.ds(OFF_PT, B), pl.ds(0, BL1)]
        title = jnp.dot(p_t_, r_t.astype(bf16),
                        preferred_element_type=f32) * (1.0 / lt)

        # ---- full: conv->relu->conv->relu->BN(batch stats)->conv->relu->pool ----
        h1 = conv_relu(x_f, OFF_W1F, b_f1)
        h2 = conv_relu(h1, OFF_W2F, b_f2)
        h2m = h2 * bn_m                                   # masked, pre-scaled 1/count
        mu = jnp.sum(h2m, axis=0, keepdims=True)          # (1, 128)
        ex2 = jnp.sum(h2m * h2, axis=0, keepdims=True)
        h2n = (h2 - mu) * jax.lax.rsqrt(ex2 - mu * mu + BN_EPS) * bn_g + bn_b
        r_f = conv_relu(h2n, OFF_W3F, b_f3)
        p_f_ = w_ref[pl.ds(OFF_PF, B), pl.ds(0, BL2)]
        full = jnp.dot(p_f_, r_f.astype(bf16),
                       preferred_element_type=f32) * (1.0 / lf3)

        # ---- concat + inter_dense as ONE K=3*128 matmul (category pre-folded) ----
        feats = jnp.concatenate([title, full, x_c], axis=-1).astype(bf16)  # (B, 384)
        inter = jnp.maximum(
            jnp.dot(feats, w_ref[pl.ds(OFF_WI, 3 * LANE), :],
                    preferred_element_type=f32) + b_int, 0.0)

        # ---- final_dense as a lane-dense matmul; real output is column 0 ----
        out_ref[...] = jnp.dot(inter.astype(bf16), w_ref[pl.ds(OFF_WF, LANE), :],
                               preferred_element_type=f32) + b_fin

    vmem = pl.BlockSpec(memory_space=pltpu.MemorySpace.VMEM)
    call = pl.pallas_call(
        kernel,
        out_shape=jax.ShapeDtypeStruct((B, LANE), jnp.float32),
        in_specs=[vmem, vmem, vmem],
        out_specs=vmem,
    )
    # TODO(synk): if B / sequence lengths grow beyond toy sizes, add a batch grid
    # with dimension_semantics=("parallel",) so v7x's second TensorCore is used.

    @jax.jit
    def forward(packed, ids_title, ids_full, x_cat):
        t_x = packed["emb_t"][ids_title].reshape(BL1, LANE)
        f_x = packed["emb_f"][ids_full].reshape(BL2, LANE)
        c_x = jnp.pad(x_cat.astype(f32), ((0, 0), (0, LANE - x_cat.shape[1])))
        act = jnp.concatenate([t_x, f_x, c_x], axis=0)     # (BL1+BL2+B, 128) f32
        out = call(act, packed["w_pack"], packed["v_pack"])
        return out[:, :1]

    return packed, forward


# ----------------------------- pure-JAX reference -----------------------------
def _ref_conv(x_ncw, w_oik, b):
    out = jax.lax.conv_general_dilated(
        x_ncw, w_oik, window_strides=(1,), padding="VALID",
        dimension_numbers=("NCH", "OIH", "NCH"))
    return out + b[None, :, None]


def reference(params, ids_title, ids_full, x_cat):
    t = jnp.transpose(params["title_emb"][ids_title], (0, 2, 1))
    t = jnp.maximum(_ref_conv(t, params["w_tc"], params["b_tc"]), 0.0)
    t = jnp.mean(t, axis=2)

    f = jnp.transpose(params["full_emb"][ids_full], (0, 2, 1))
    f = jnp.maximum(_ref_conv(f, params["w_fc1"], params["b_fc1"]), 0.0)
    f = jnp.maximum(_ref_conv(f, params["w_fc2"], params["b_fc2"]), 0.0)
    mu = jnp.mean(f, axis=(0, 2), keepdims=True)
    var = jnp.mean((f - mu) ** 2, axis=(0, 2), keepdims=True)
    f = (f - mu) / jnp.sqrt(var + BN_EPS)
    f = f * params["bn_g"][None, :, None] + params["bn_b"][None, :, None]
    f = jnp.maximum(_ref_conv(f, params["w_fc3"], params["b_fc3"]), 0.0)
    f = jnp.mean(f, axis=2)

    c = x_cat @ params["w_cat"].T + params["b_cat"]
    concat = jnp.concatenate([t, f, c], axis=1)
    out = jnp.maximum(concat @ params["w_inter"].T + params["b_inter"], 0.0)
    return out @ params["w_final"].T + params["b_final"]


# ----------------------------------- main -------------------------------------
if __name__ == "__main__":
    n_tokens, n_cat, hid = 50, 8, 32
    hid2 = 2 * hid
    concat_features = 3 * hid2       # title(2H) + full(2H) + category(2H)
    B, L_title, L_full = 2, 8, 16

    key = jax.random.PRNGKey(0)
    ks = jax.random.split(key, 20)
    rn = lambda k, shape, s=0.1: (s * jax.random.normal(k, shape)).astype(jnp.float32)

    params = {
        "title_emb": rn(ks[0], (n_tokens, hid)),
        "w_tc": rn(ks[1], (hid2, hid, 3)),  "b_tc": rn(ks[2], (hid2,)),
        "full_emb": rn(ks[3], (n_tokens, hid)),
        "w_fc1": rn(ks[4], (hid2, hid, 3)), "b_fc1": rn(ks[5], (hid2,)),
        "w_fc2": rn(ks[6], (hid2, hid2, 3)), "b_fc2": rn(ks[7], (hid2,)),
        "bn_g": (1.0 + rn(ks[8], (hid2,))), "bn_b": rn(ks[9], (hid2,)),
        "w_fc3": rn(ks[10], (hid2, hid2, 3)), "b_fc3": rn(ks[11], (hid2,)),
        "w_cat": rn(ks[12], (hid2, n_cat)), "b_cat": rn(ks[13], (hid2,)),
        "w_inter": rn(ks[14], (hid2, concat_features)), "b_inter": rn(ks[15], (hid2,)),
        "w_final": rn(ks[16], (1, hid2)), "b_final": rn(ks[17], (1,)),
    }

    ids_title = jax.random.randint(ks[18], (B, L_title), 0, n_tokens, dtype=jnp.int32)
    ids_full = jax.random.randint(ks[19], (B, L_full), 0, n_tokens, dtype=jnp.int32)
    x_cat = rn(jax.random.PRNGKey(42), (B, n_cat), 1.0)

    packed, forward = make_three_inputs_net(params, B, L_title, L_full)
    out = jax.block_until_ready(forward(packed, ids_title, ids_full, x_cat))

    ref = jax.block_until_ready(reference(params, ids_title, ids_full, x_cat))
    assert out.shape == (B, 1)
    assert jnp.allclose(out, ref, rtol=3e-2, atol=3e-2), (out, ref)

    print("KERNEL_OK")
</pallas_src>

<mosaic_0001>
module attributes {stable_mosaic.version = 11 : i64} {
  func.func @kernel(%arg0: memref<50x128xf32, #tpu.memory_space<vmem>>, %arg1: memref<2064x128xbf16, #tpu.memory_space<vmem>>, %arg2: memref<40x128xf32, #tpu.memory_space<vmem>>, %arg3: memref<2x128xf32, #tpu.memory_space<vmem>>) attributes {dimension_semantics = [], scalar_prefetch = 0 : i64, scratch_operands = 0 : i64, tpu.core_type = #tpu.core_type<tc>} {
    %c0 = arith.constant 0 : index
    %c0_0 = arith.constant 0 : index
    %0 = vector.load %arg2[%c0, %c0_0] : memref<40x128xf32, #tpu.memory_space<vmem>>, vector<1x128xf32>
    %c1 = arith.constant 1 : index
    %c0_1 = arith.constant 0 : index
    %1 = vector.load %arg2[%c1, %c0_1] : memref<40x128xf32, #tpu.memory_space<vmem>>, vector<1x128xf32>
    %c2 = arith.constant 2 : index
    %c0_2 = arith.constant 0 : index
    %2 = vector.load %arg2[%c2, %c0_2] : memref<40x128xf32, #tpu.memory_space<vmem>>, vector<1x128xf32>
    %c3 = arith.constant 3 : index
    %c0_3 = arith.constant 0 : index
    %3 = vector.load %arg2[%c3, %c0_3] : memref<40x128xf32, #tpu.memory_space<vmem>>, vector<1x128xf32>
    %c4 = arith.constant 4 : index
    %c0_4 = arith.constant 0 : index
    %4 = vector.load %arg2[%c4, %c0_4] : memref<40x128xf32, #tpu.memory_space<vmem>>, vector<1x128xf32>
    %c5 = arith.constant 5 : index
    %c0_5 = arith.constant 0 : index
    %5 = vector.load %arg2[%c5, %c0_5] : memref<40x128xf32, #tpu.memory_space<vmem>>, vector<1x128xf32>
    %c6 = arith.constant 6 : index
    %c0_6 = arith.constant 0 : index
    %6 = vector.load %arg2[%c6, %c0_6] : memref<40x128xf32, #tpu.memory_space<vmem>>, vector<1x128xf32>
    %c7 = arith.constant 7 : index
    %c0_7 = arith.constant 0 : index
    %7 = vector.load %arg2[%c7, %c0_7] : memref<40x128xf32, #tpu.memory_space<vmem>>, vector<1x128xf32>
    %c8 = arith.constant 8 : index
    %c0_8 = arith.constant 0 : index
    %8 = vector.load %arg2[%c8, %c0_8] : memref<40x128xf32, #tpu.memory_space<vmem>>, vector<32x1xf32>
    %c0_9 = arith.constant 0 : index
    %c0_10 = arith.constant 0 : index
    %9 = vector.load %arg0[%c0_9, %c0_10] : memref<50x128xf32, #tpu.memory_space<vmem>>, vector<16x128xf32>
    %c16 = arith.constant 16 : index
    %c0_11 = arith.constant 0 : index
    %10 = vector.load %arg0[%c16, %c0_11] : memref<50x128xf32, #tpu.memory_space<vmem>>, vector<32x128xf32>
    %c48 = arith.constant 48 : index
    %c0_12 = arith.constant 0 : index
    %11 = vector.load %arg0[%c48, %c0_12] : memref<50x128xf32, #tpu.memory_space<vmem>>, vector<2x128xf32>
    %c15_i32 = arith.constant 15 : i32
    %12 = tpu.dynamic_rotate %9 by %c15_i32 dim 0 : vector<16x128xf32>, i32 -> vector<16x128xf32>
    %c14_i32 = arith.constant 14 : i32
    %13 = tpu.dynamic_rotate %9 by %c14_i32 dim 0 : vector<16x128xf32>, i32 -> vector<16x128xf32>
    %14 = tpu.concatenate %9, %12, %13 in 1 : vector<16x128xf32>, vector<16x128xf32>, vector<16x128xf32> -> vector<16x384xf32>
    %15 = arith.truncf %14 : vector<16x384xf32> to vector<16x384xbf16>
    %c0_13 = arith.constant 0 : index
    %c0_14 = arith.constant 0 : index
    %16 = vector.load %arg1[%c0_13, %c0_14] : memref<2064x128xbf16, #tpu.memory_space<vmem>>, vector<384x128xbf16>
    %cst = arith.constant dense<0.000000e+00> : vector<16x128xf32>
    %17 = tpu.matmul %15, %16, %cst {dimension_numbers = #tpu.dot_dimension_numbers<[1], [0], [0], [1], [0, 0, 1, 1], [], []>} : vector<16x384xbf16>, vector<384x128xbf16>, vector<16x128xf32> -> vector<16x128xf32>
    %18 = vector.broadcast %0 : vector<1x128xf32> to vector<16x128xf32>
    %19 = arith.addf %17, %18 : vector<16x128xf32>
    %cst_15 = arith.constant 0.000000e+00 : f32
    %20 = vector.broadcast %cst_15 : f32 to vector<16x128xf32>
    %21 = arith.maximumf %19, %20 : vector<16x128xf32>
    %c2048 = arith.constant 2048 : index
    %c0_16 = arith.constant 0 : index
    %22 = vector.load %arg1[%c2048, %c0_16] : memref<2064x128xbf16, #tpu.memory_space<vmem>>, vector<2x16xbf16>
    %23 = arith.truncf %21 : vector<16x128xf32> to vector<16x128xbf16>
    %cst_17 = arith.constant dense<0.000000e+00> : vector<2x128xf32>
    %24 = tpu.matmul %22, %23, %cst_17 {dimension_numbers = #tpu.dot_dimension_numbers<[1], [0], [0], [1], [0, 0, 1, 1], [], []>} : vector<2x16xbf16>, vector<16x128xbf16>, vector<2x128xf32> -> vector<2x128xf32>
    %cst_18 = arith.constant 0.166666672 : f32
    %25 = vector.broadcast %cst_18 : f32 to vector<2x128xf32>
    %26 = arith.mulf %24, %25 : vector<2x128xf32>
    %c31_i32 = arith.constant 31 : i32
    %27 = tpu.dynamic_rotate %10 by %c31_i32 dim 0 : vector<32x128xf32>, i32 -> vector<32x128xf32>
    %c30_i32 = arith.constant 30 : i32
    %28 = tpu.dynamic_rotate %10 by %c30_i32 dim 0 : vector<32x128xf32>, i32 -> vector<32x128xf32>
    %29 = tpu.concatenate %10, %27, %28 in 1 : vector<32x128xf32>, vector<32x128xf32>, vector<32x128xf32> -> vector<32x384xf32>
    %30 = arith.truncf %29 : vector<32x384xf32> to vector<32x384xbf16>
    %c384 = arith.constant 384 : index
    %c0_19 = arith.constant 0 : index
    %31 = vector.load %arg1[%c384, %c0_19] : memref<2064x128xbf16, #tpu.memory_space<vmem>>, vector<384x128xbf16>
    %cst_20 = arith.constant dense<0.000000e+00> : vector<32x128xf32>
    %32 = tpu.matmul %30, %31, %cst_20 {dimension_numbers = #tpu.dot_dimension_numbers<[1], [0], [0], [1], [0, 0, 1, 1], [], []>} : vector<32x384xbf16>, vector<384x128xbf16>, vector<32x128xf32> -> vector<32x128xf32>
    %33 = vector.broadcast %1 : vector<1x128xf32> to vector<32x128xf32>
    %34 = arith.addf %32, %33 : vector<32x128xf32>
    %cst_21 = arith.constant 0.000000e+00 : f32
    %35 = vector.broadcast %cst_21 : f32 to vector<32x128xf32>
    %36 = arith.maximumf %34, %35 : vector<32x128xf32>
    %c31_i32_22 = arith.constant 31 : i32
    %37 = tpu.dynamic_rotate %36 by %c31_i32_22 dim 0 : vector<32x128xf32>, i32 -> vector<32x128xf32>
    %c30_i32_23 = arith.constant 30 : i32
    %38 = tpu.dynamic_rotate %36 by %c30_i32_23 dim 0 : vector<32x128xf32>, i32 -> vector<32x128xf32>
    %39 = tpu.concatenate %36, %37, %38 in 1 : vector<32x128xf32>, vector<32x128xf32>, vector<32x128xf32> -> vector<32x384xf32>
    %40 = arith.truncf %39 : vector<32x384xf32> to vector<32x384xbf16>
    %c768 = arith.constant 768 : index
    %c0_24 = arith.constant 0 : index
    %41 = vector.load %arg1[%c768, %c0_24] : memref<2064x128xbf16, #tpu.memory_space<vmem>>, vector<384x128xbf16>
    %cst_25 = arith.constant dense<0.000000e+00> : vector<32x128xf32>
    %42 = tpu.matmul %40, %41, %cst_25 {dimension_numbers = #tpu.dot_dimension_numbers<[1], [0], [0], [1], [0, 0, 1, 1], [], []>} : vector<32x384xbf16>, vector<384x128xbf16>, vector<32x128xf32> -> vector<32x128xf32>
    %43 = vector.broadcast %2 : vector<1x128xf32> to vector<32x128xf32>
    %44 = arith.addf %42, %43 : vector<32x128xf32>
    %cst_26 = arith.constant 0.000000e+00 : f32
    %45 = vector.broadcast %cst_26 : f32 to vector<32x128xf32>
    %46 = arith.maximumf %44, %45 : vector<32x128xf32>
    %47 = vector.broadcast %8 : vector<32x1xf32> to vector<32x128xf32>
    %48 = arith.mulf %46, %47 : vector<32x128xf32>
    %cst_27 = arith.constant dense<0.000000e+00> : vector<128xf32>
    %49 = vector.multi_reduction <add>, %48, %cst_27 [0] : vector<32x128xf32> to vector<128xf32>
    %50 = vector.shape_cast %49 : vector<128xf32> to vector<1x128xf32>
    %51 = arith.mulf %48, %46 : vector<32x128xf32>
    %cst_28 = arith.constant dense<0.000000e+00> : vector<128xf32>
    %52 = vector.multi_reduction <add>, %51, %cst_28 [0] : vector<32x128xf32> to vector<128xf32>
    %53 = vector.shape_cast %52 : vector<128xf32> to vector<1x128xf32>
    %54 = vector.broadcast %50 : vector<1x128xf32> to vector<32x128xf32>
    %55 = arith.subf %46, %54 : vector<32x128xf32>
    %56 = arith.mulf %50, %50 : vector<1x128xf32>
    %57 = arith.subf %53, %56 : vector<1x128xf32>
    %cst_29 = arith.constant 9.99999974E-6 : f32
    %58 = vector.broadcast %cst_29 : f32 to vector<1x128xf32>
    %59 = arith.addf %57, %58 : vector<1x128xf32>
    %60 = math.rsqrt %59 : vector<1x128xf32>
    %61 = vector.broadcast %60 : vector<1x128xf32> to vector<32x128xf32>
    %62 = arith.mulf %55, %61 : vector<32x128xf32>
    %63 = vector.broadcast %3 : vector<1x128xf32> to vector<32x128xf32>
    %64 = arith.mulf %62, %63 : vector<32x128xf32>
    %65 = vector.broadcast %4 : vector<1x128xf32> to vector<32x128xf32>
    %66 = arith.addf %64, %65 : vector<32x128xf32>
    %c31_i32_30 = arith.constant 31 : i32
    %67 = tpu.dynamic_rotate %66 by %c31_i32_30 dim 0 : vector<32x128xf32>, i32 -> vector<32x128xf32>
    %c30_i32_31 = arith.constant 30 : i32
    %68 = tpu.dynamic_rotate %66 by %c30_i32_31 dim 0 : vector<32x128xf32>, i32 -> vector<32x128xf32>
    %69 = tpu.concatenate %66, %67, %68 in 1 : vector<32x128xf32>, vector<32x128xf32>, vector<32x128xf32> -> vector<32x384xf32>
    %70 = arith.truncf %69 : vector<32x384xf32> to vector<32x384xbf16>
    %c1152 = arith.constant 1152 : index
    %c0_32 = arith.constant 0 : index
    %71 = vector.load %arg1[%c1152, %c0_32] : memref<2064x128xbf16, #tpu.memory_space<vmem>>, vector<384x128xbf16>
    %cst_33 = arith.constant dense<0.000000e+00> : vector<32x128xf32>
    %72 = tpu.matmul %70, %71, %cst_33 {dimension_numbers = #tpu.dot_dimension_numbers<[1], [0], [0], [1], [0, 0, 1, 1], [], []>} : vector<32x384xbf16>, vector<384x128xbf16>, vector<32x128xf32> -> vector<32x128xf32>
    %73 = vector.broadcast %5 : vector<1x128xf32> to vector<32x128xf32>
    %74 = arith.addf %72, %73 : vector<32x128xf32>
    %cst_34 = arith.constant 0.000000e+00 : f32
    %75 = vector.broadcast %cst_34 : f32 to vector<32x128xf32>
    %76 = arith.maximumf %74, %75 : vector<32x128xf32>
    %c2056 = arith.constant 2056 : index
    %c0_35 = arith.constant 0 : index
    %77 = vector.load %arg1[%c2056, %c0_35] : memref<2064x128xbf16, #tpu.memory_space<vmem>>, vector<2x32xbf16>
    %78 = arith.truncf %76 : vector<32x128xf32> to vector<32x128xbf16>
    %cst_36 = arith.constant dense<0.000000e+00> : vector<2x128xf32>
    %79 = tpu.matmul %77, %78, %cst_36 {dimension_numbers = #tpu.dot_dimension_numbers<[1], [0], [0], [1], [0, 0, 1, 1], [], []>} : vector<2x32xbf16>, vector<32x128xbf16>, vector<2x128xf32> -> vector<2x128xf32>
    %cst_37 = arith.constant 1.000000e-01 : f32
    %80 = vector.broadcast %cst_37 : f32 to vector<2x128xf32>
    %81 = arith.mulf %79, %80 : vector<2x128xf32>
    %82 = tpu.concatenate %26, %81, %11 in 1 : vector<2x128xf32>, vector<2x128xf32>, vector<2x128xf32> -> vector<2x384xf32>
    %83 = arith.truncf %82 : vector<2x384xf32> to vector<2x384xbf16>
    %c1536 = arith.constant 1536 : index
    %c0_38 = arith.constant 0 : index
    %84 = vector.load %arg1[%c1536, %c0_38] : memref<2064x128xbf16, #tpu.memory_space<vmem>>, vector<384x128xbf16>
    %cst_39 = arith.constant dense<0.000000e+00> : vector<2x128xf32>
    %85 = tpu.matmul %83, %84, %cst_39 {dimension_numbers = #tpu.dot_dimension_numbers<[1], [0], [0], [1], [0, 0, 1, 1], [], []>} : vector<2x384xbf16>, vector<384x128xbf16>, vector<2x128xf32> -> vector<2x128xf32>
    %86 = vector.broadcast %6 : vector<1x128xf32> to vector<2x128xf32>
    %87 = arith.addf %85, %86 : vector<2x128xf32>
    %cst_40 = arith.constant 0.000000e+00 : f32
    %88 = vector.broadcast %cst_40 : f32 to vector<2x128xf32>
    %89 = arith.maximumf %87, %88 : vector<2x128xf32>
    %90 = arith.truncf %89 : vector<2x128xf32> to vector<2x128xbf16>
    %c1920 = arith.constant 1920 : index
    %c0_41 = arith.constant 0 : index
    %91 = vector.load %arg1[%c1920, %c0_41] : memref<2064x128xbf16, #tpu.memory_space<vmem>>, vector<128x128xbf16>
    %cst_42 = arith.constant dense<0.000000e+00> : vector<2x128xf32>
    %92 = tpu.matmul %90, %91, %cst_42 {dimension_numbers = #tpu.dot_dimension_numbers<[1], [0], [0], [1], [0, 0, 1, 1], [], []>} : vector<2x128xbf16>, vector<128x128xbf16>, vector<2x128xf32> -> vector<2x128xf32>
    %93 = vector.broadcast %7 : vector<1x128xf32> to vector<2x128xf32>
    %94 = arith.addf %92, %93 : vector<2x128xf32>
    %c0_43 = arith.constant 0 : index
    %c0_44 = arith.constant 0 : index
    %95 = vector.load %arg3[%c0_43, %c0_44] : memref<2x128xf32, #tpu.memory_space<vmem>>, vector<2x128xf32>
    tpu.vector_store %arg3[%c0_43, %c0_44], %94 {strides = array<i32>} : memref<2x128xf32, #tpu.memory_space<vmem>>, vector<2x128xf32>,
    return
  }
}

</mosaic_0001>

<llo_original>
// kernel: forward.1
$region0: #{forward.1}
  #allocation0 [shape = 'u32[]', space=smem, size = 0x4, offset = 0x4, fixed_abs, tag = 'smem constant byte address 0x4 - core index']
  #allocation1 [shape = 'u32[144,128]{1,0:T(1,128)}', space=vmem, size = 0x12000, scoped, tag = 'internal scratch']
  %s0 = inlined_call_operand.vmem [shape: f32[50,128], index: 0, kind: input, shape index: {}]
  %s1 = inlined_call_operand.hbm [shape: bf16[2064,128], index: 1, kind: input, shape index: {}]
  %s2 = inlined_call_operand.vmem [shape: f32[40,128], index: 2, kind: input, shape index: {}]
  %s3 = inlined_call_operand.vmem [shape: f32[2,128], index: 3, kind: output, shape index: {}]
  %s4 = sld [smem:[#allocation0]]
  $region26: #{forward.1} parent=0
    _
  %s6 = ssub.s32 1, %s4
  %s7 = scalar_select 0, %s6, %s4
  $region1: #{forward.1} parent=0
    #allocation2 [shape = 'u8[528384]{0}', space=vmem, size = 0x81000, scoped, tag = 'input window, operand 1, single buffered']
    #allocation3 [shape = 's32[1]{0}', space=sflag, size = 0x4, scoped, tag = 'scoped memory for forward.1']
    %8 = vsyncpa [#allocation3], 0
    // Predicated region
    $region2: #{forward.1} parent=1 // pred_check
      _
    $region3: #{forward.1} parent=1 // pred_check_branch
      %10 = sbr.rel (0) target = $region5
    $region4: #{forward.1} parent=1 // pred_region
      _
    $region5: #{forward.1} parent=1 // pred_fallthru
      _
    // Predicated region
    $region6: #{forward.1} parent=1 // pred_check
      _
    $region7: #{forward.1} parent=1 // pred_check_branch
      %12 = sbr.rel (0) target = $region9
    $region8: #{forward.1} parent=1 // pred_region
      %s14 = ssub.s32 16512, 16512
      %15 = vsyncadd [#allocation3], %s14
      %s16 = sshll.u32 [#allocation2], 4
      %s17 = int_to_ptr.vmem [resolvable:$true] %s16
      %22 = dma.hbm_to_vmem [thread:$0]  %s1, 16512, %s17, [#allocation3], 64, 64, 4
    $region9: #{forward.1} parent=1 // pred_fallthru
      _
    // Predicated region
    $region10: #{forward.1} parent=1 // pred_check
      _
    $region11: #{forward.1} parent=1 // pred_check_branch
      %24 = sbr.rel (0) target = $region13
    $region12: #{forward.1} parent=1 // pred_region
      _
    $region13: #{forward.1} parent=1 // pred_fallthru
      _
    // Predicated region
    $region14: #{forward.1} parent=1 // pred_check
      _
    $region15: #{forward.1} parent=1 // pred_check_branch
      %26 = sbr.rel (0) target = $region17
    $region16: #{forward.1} parent=1 // pred_region
      %27 = dma.done [#allocation3], 16512
    $region17: #{forward.1} parent=1 // pred_fallthru
      _
    %v29 = vld [vmem:[%s2] sm:$0x1]
    %v30 = vld [vmem:[%s2 + $0x1] sm:$0x1]
    %v31 = vld [vmem:[%s2 + $0x2] sm:$0x1]
    %v32 = vld [vmem:[%s2 + $0x3] sm:$0x1]
    %v33 = vld [vmem:[%s2 + $0x4] sm:$0x1]
    %v34 = vld [vmem:[%s2 + $0x5] sm:$0x1]
    %v35 = vld [vmem:[%s2 + $0x6] sm:$0x1]
    %v36 = vld [vmem:[%s2 + $0x7] sm:$0x1]
    %v37 = vld [vmem:[%s2 + $0x8] sm:$0xff]
    %v38 = vld [vmem:[%s2 + $0x10] sm:$0xff]
    %v39 = vld [vmem:[%s2 + $0x18] sm:$0xff]
    %v40 = vld [vmem:[%s2 + $0x20] sm:$0xff]
    %v41 = vld [vmem:[%s0] sm:$0xff]
    %v42 = vld [vmem:[%s0 + $0x8] sm:$0xff]
    %v43 = vld [vmem:[%s0 + $0x10] sm:$0xff]
    %v44 = vld [vmem:[%s0 + $0x18] sm:$0xff]
    %v45 = vld [vmem:[%s0 + $0x20] sm:$0xff]
    %v46 = vld [vmem:[%s0 + $0x28] sm:$0xff]
    %v47 = vld [vmem:[%s0 + $0x30] sm:$0x3]
    %v48 = vrot.slane %v41, 1
    %v49 = vrot.slane %v42, 1
    %v50 = vlaneseq
    %v51 = vshrl.u32 %v50, 7
    %vm52 = vcmp.lt.s32.totalorder %v51, 7
    %v53 = vsel %vm52, %v48, %v49
    %v54 = vsel %vm52, %v49, %v48
    %v55 = vrot.slane %v41, 2
    %v56 = vrot.slane %v42, 2
    %vm57 = vcmp.lt.s32.totalorder %v51, 6
    %v58 = vsel %vm57, %v55, %v56
    %v59 = vsel %vm57, %v56, %v55
    %v60 = vpack.c.bf16 %v42, %v41
    %v61 = vpack.c.bf16 %v54, %v53
    %v62 = vpack.c.bf16 %v59, %v58
    %v63 = vld [vmem:[#allocation2] sm:$0xf]
    %v64 = vld [vmem:[#allocation2 + $0x4] sm:$0xf]
    %v65 = vld [vmem:[#allocation2 + $0x8] sm:$0xf]
    %v66 = vld [vmem:[#allocation2 + $0xc] sm:$0xf]
    %v67 = vld [vmem:[#allocation2 + $0x10] sm:$0xf]
    %v68 = vld [vmem:[#allocation2 + $0x14] sm:$0xf]
    %v69 = vld [vmem:[#allocation2 + $0x18] sm:$0xf]
    %v70 = vld [vmem:[#allocation2 + $0x1c] sm:$0xf]
    %v71 = vld [vmem:[#allocation2 + $0x20] sm:$0xf]
    %v72 = vld [vmem:[#allocation2 + $0x24] sm:$0xf]
    %v73 = vld [vmem:[#allocation2 + $0x28] sm:$0xf]
    %v74 = vld [vmem:[#allocation2 + $0x2c] sm:$0xf]
    %v75 = vld [vmem:[#allocation2 + $0x30] sm:$0xf]
    %v76 = vld [vmem:[#allocation2 + $0x34] sm:$0xf]
    %v77 = vld [vmem:[#allocation2 + $0x38] sm:$0xf]
    %v78 = vld [vmem:[#allocation2 + $0x3c] sm:$0xf]
    %v79 = vld [vmem:[#allocation2 + $0x40] sm:$0xf]
    %v80 = vld [vmem:[#allocation2 + $0x44] sm:$0xf]
    %v81 = vld [vmem:[#allocation2 + $0x48] sm:$0xf]
    %v82 = vld [vmem:[#allocation2 + $0x4c] sm:$0xf]
    %v83 = vld [vmem:[#allocation2 + $0x50] sm:$0xf]
    %v84 = vld [vmem:[#allocation2 + $0x54] sm:$0xf]
    %v85 = vld [vmem:[#allocation2 + $0x58] sm:$0xf]
    %v86 = vld [vmem:[#allocation2 + $0x5c] sm:$0xf]
    %v87 = vld [vmem:[#allocation2 + $0x60] sm:$0xf]
    %v88 = vld [vmem:[#allocation2 + $0x64] sm:$0xf]
    %v89 = vld [vmem:[#allocation2 + $0x68] sm:$0xf]
    %v90 = vld [vmem:[#allocation2 + $0x6c] sm:$0xf]
    %v91 = vld [vmem:[#allocation2 + $0x70] sm:$0xf]
    %v92 = vld [vmem:[#allocation2 + $0x74] sm:$0xf]
    %v93 = vld [vmem:[#allocation2 + $0x78] sm:$0xf]
    %v94 = vld [vmem:[#allocation2 + $0x7c] sm:$0xf]
    %v95 = vld [vmem:[#allocation2 + $0x80] sm:$0xf]
    %v96 = vld [vmem:[#allocation2 + $0x84] sm:$0xf]
    %v97 = vld [vmem:[#allocation2 + $0x88] sm:$0xf]
    %v98 = vld [vmem:[#allocation2 + $0x8c] sm:$0xf]
    %v99 = vld [vmem:[#allocation2 + $0x90] sm:$0xf]
    %v100 = vld [vmem:[#allocation2 + $0x94] sm:$0xf]
    %v101 = vld [vmem:[#allocation2 + $0x98] sm:$0xf]
    %v102 = vld [vmem:[#allocation2 + $0x9c] sm:$0xf]
    %v103 = vld [vmem:[#allocation2 + $0xa0] sm:$0xf]
    %v104 = vld [vmem:[#allocation2 + $0xa4] sm:$0xf]
    %v105 = vld [vmem:[#allocation2 + $0xa8] sm:$0xf]
    %v106 = vld [vmem:[#allocation2 + $0xac] sm:$0xf]
    %v107 = vld [vmem:[#allocation2 + $0xb0] sm:$0xf]
    %v108 = vld [vmem:[#allocation2 + $0xb4] sm:$0xf]
    %v109 = vld [vmem:[#allocation2 + $0xb8] sm:$0xf]
    %v110 = vld [vmem:[#allocation2 + $0xbc] sm:$0xf]
    %v111 = vlaneseq
    %v112 = vshrl.u32 %v111, 7
    %v113 = vsub.s32 0, %v112
    %v114 = vrot.slane %v29, %v113
    %v163 = vunpack.c.l.b16 %v63
    %v164 = vunpack.c.l.b16 %v64
    %v165 = vunpack.c.l.b16 %v65
    %v166 = vunpack.c.l.b16 %v66
    %v167 = vunpack.c.l.b16 %v67
    %v168 = vunpack.c.l.b16 %v68
    %v169 = vunpack.c.l.b16 %v69
    %v170 = vunpack.c.l.b16 %v70
    %v171 = vunpack.c.l.b16 %v71
    %v172 = vunpack.c.l.b16 %v72
    %v173 = vunpack.c.l.b16 %v73
    %v174 = vunpack.c.l.b16 %v74
    %v175 = vunpack.c.l.b16 %v75
    %v176 = vunpack.c.l.b16 %v76
    %v177 = vunpack.c.l.b16 %v77
    %v178 = vunpack.c.l.b16 %v78
    %v179 = vunpack.c.l.b16 %v79
    %v180 = vunpack.c.l.b16 %v80
    %v181 = vunpack.c.l.b16 %v81
    %v182 = vunpack.c.l.b16 %v82
    %v183 = vunpack.c.l.b16 %v83
    %v184 = vunpack.c.l.b16 %v84
    %v185 = vunpack.c.l.b16 %v85
    %v186 = vunpack.c.l.b16 %v86
    %v187 = vunpack.c.l.b16 %v87
    %v188 = vunpack.c.l.b16 %v88
    %v189 = vunpack.c.l.b16 %v89
    %v190 = vunpack.c.l.b16 %v90
    %v191 = vunpack.c.l.b16 %v91
    %v192 = vunpack.c.l.b16 %v92
    %v193 = vunpack.c.l.b16 %v93
    %v194 = vunpack.c.l.b16 %v94
    %v195 = vunpack.c.l.b16 %v95
    %v196 = vunpack.c.l.b16 %v96
    %v197 = vunpack.c.l.b16 %v97
    %v198 = vunpack.c.l.b16 %v98
    %v199 = vunpack.c.l.b16 %v99
    %v200 = vunpack.c.l.b16 %v100
    %v201 = vunpack.c.l.b16 %v101
    %v202 = vunpack.c.l.b16 %v102
    %v203 = vunpack.c.l.b16 %v103
    %v204 = vunpack.c.l.b16 %v104
    %v205 = vunpack.c.l.b16 %v105
    %v206 = vunpack.c.l.b16 %v106
    %v207 = vunpack.c.l.b16 %v107
    %v208 = vunpack.c.l.b16 %v108
    %v209 = vunpack.c.l.b16 %v109
    %v210 = vunpack.c.l.b16 %v110
    %v211 = vpack.c.b16 %v164, %v163
    %v212 = vpack.c.b16 %v166, %v165
    %v213 = vpack.c.b16 %v168, %v167
    %v214 = vpack.c.b16 %v170, %v169
    %v215 = vpack.c.b16 %v172, %v171
    %v216 = vpack.c.b16 %v174, %v173
    %v217 = vpack.c.b16 %v176, %v175
    %v218 = vpack.c.b16 %v178, %v177
    %v219 = vpack.c.b16 %v180, %v179
    %v220 = vpack.c.b16 %v182, %v181
    %v221 = vpack.c.b16 %v184, %v183
    %v222 = vpack.c.b16 %v186, %v185
    %v223 = vpack.c.b16 %v188, %v187
    %v224 = vpack.c.b16 %v190, %v189
    %v225 = vpack.c.b16 %v192, %v191
    %v226 = vpack.c.b16 %v194, %v193
    %v227 = vpack.c.b16 %v196, %v195
    %v228 = vpack.c.b16 %v198, %v197
    %v229 = vpack.c.b16 %v200, %v199
    %v230 = vpack.c.b16 %v202, %v201
    %v231 = vpack.c.b16 %v204, %v203
    %v232 = vpack.c.b16 %v206, %v205
    %v233 = vpack.c.b16 %v208, %v207
    %v234 = vpack.c.b16 %v210, %v209
    %259 = vmatprep.subr.bf16.mxu0 0
    %260 = vmatpush1.bf16.msra.mxu0 %v211
    %261 = vmatprep.subr.bf16.mxu0 0
    %262 = vmatpush1.bf16.msra.mxu0 %v212
    %263 = vmatprep.subr.bf16.mxu0 0
    %264 = vmatpush1.bf16.msra.mxu0 %v213
    %265 = vmatprep.subr.bf16.mxu0 0
    %266 = vmatpush1.bf16.msra.mxu0 %v214
    %267 = vmatprep.subr.bf16.mxu0 0
    %268 = vmatpush1.bf16.msra.mxu0 %v215
    %269 = vmatprep.subr.bf16.mxu0 0
    %270 = vmatpush1.bf16.msra.mxu0 %v216
    %271 = vmatprep.subr.bf16.mxu0 0
    %272 = vmatpush1.bf16.msra.mxu0 %v217
    %273 = vmatprep.subr.bf16.mxu0 0
    %274 = vmatpush1.bf16.msra.mxu0 %v218
    %275 = vmatprep.subr.bf16.mxu0 0
    %276 = vmatpush1.bf16.msra.mxu0 %v219
    %277 = vmatprep.subr.bf16.mxu0 0
    %278 = vmatpush1.bf16.msra.mxu0 %v220
    %279 = vmatprep.subr.bf16.mxu0 0
    %280 = vmatpush1.bf16.msra.mxu0 %v221
    %281 = vmatprep.subr.bf16.mxu0 0
    %282 = vmatpush1.bf16.msra.mxu0 %v222
    %283 = vmatprep.subr.bf16.mxu0 0
    %284 = vmatpush1.bf16.msra.mxu0 %v223
    %285 = vmatprep.subr.bf16.mxu0 0
    %286 = vmatpush1.bf16.msra.mxu0 %v224
    %287 = vmatprep.subr.bf16.mxu0 0
    %288 = vmatpush1.bf16.msra.mxu0 %v225
    %289 = vmatprep.subr.bf16.mxu0 0
    %290 = vmatpush1.bf16.msra.mxu0 %v226
    %291 = vmatprep.mubr.bf16.mxu0 %v61
    %292 = vmatmul.mubr.bf16.gmra.mrb[0].mxu0 %v60
    %v293 = vpop.f32.mrb[0].mxu0
    %v294 = vadd.f32 %v114, %v293
    %v295 = vpop.f32.mrb[0].mxu0
    %v296 = vpop.f32.mrb[0].mxu0
    %v297 = vadd.f32 %v114, %v296
    %v298 = vpop.f32.mrb[0].mxu0
    %299 = vdwg.mxu0
    %300 = vmatprep.subr.bf16.mxu0 0
    %301 = vmatpush1.bf16.msra.mxu0 %v227
    %302 = vmatprep.subr.bf16.mxu0 0
    %303 = vmatpush1.bf16.msra.mxu0 %v228
    %304 = vmatprep.subr.bf16.mxu0 0
    %305 = vmatpush1.bf16.msra.mxu0 %v229
    %306 = vmatprep.subr.bf16.mxu0 0
    %307 = vmatpush1.bf16.msra.mxu0 %v230
    %308 = vmatprep.subr.bf16.mxu0 0
    %309 = vmatpush1.bf16.msra.mxu0 %v231
    %310 = vmatprep.subr.bf16.mxu0 0
    %311 = vmatpush1.bf16.msra.mxu0 %v232
    %312 = vmatprep.subr.bf16.mxu0 0
    %313 = vmatpush1.bf16.msra.mxu0 %v233
    %314 = vmatprep.subr.bf16.mxu0 0
    %315 = vmatpush1.bf16.msra.mxu0 %v234
    %316 = vmatprep.subr.bf16.mxu0 0
    %317 = vmatpush1.bf16.msra.mxu0 0
    %318 = vmatprep.subr.bf16.mxu0 0
    %319 = vmatpush1.bf16.msra.mxu0 0
    %320 = vmatprep.subr.bf16.mxu0 0
    %321 = vmatpush1.bf16.msra.mxu0 0
    %322 = vmatprep.subr.bf16.mxu0 0
    %323 = vmatpush1.bf16.msra.mxu0 0
    %324 = vmatprep.subr.bf16.mxu0 0
    %325 = vmatpush1.bf16.msra.mxu0 0
    %326 = vmatprep.subr.bf16.mxu0 0
    %327 = vmatpush1.bf16.msra.mxu0 0
    %328 = vmatprep.subr.bf16.mxu0 0
    %329 = vmatpush1.bf16.msra.mxu0 0
    %330 = vmatprep.subr.bf16.mxu0 0
    %331 = vmatpush1.bf16.msra.mxu0 0
    %332 = vmatprep.mubr.bf16.mxu0 0
    %333 = vmatmul.mubr.bf16.gmra.mrb[0].mxu0 %v62
    %v334 = vpop.f32.mrb[0].mxu0
    %v335 = vadd.f32 %v294, %v334
    %v336 = vpop.f32.mrb[0].mxu0
    %v337 = vpop.f32.mrb[0].mxu0
    %v338 = vadd.f32 %v297, %v337
    %v339 = vpop.f32.mrb[0].mxu0
    %340 = vdwg.mxu0
    %v341 = vmax.f32 %v335, 0.0
    %v342 = vmax.f32 %v338, 0.0
    %v343 = vld [vmem:[#allocation2 + $0x400] sm:$0x1]
    %v344 = vpack.c.bf16 %v342, %v341
    %vm345 = vcmask 130048
    %v347 = vsel %vm345, %v343, 0
    %349 = vmatprep.subr.bf16.mxu0 0
    %350 = vmatpush1.bf16.msra.mxu0 %v344
    %351 = vmatprep.subr.bf16.mxu0 0
    %352 = vmatpush1.bf16.msra.mxu0 0
    %353 = vmatprep.subr.bf16.mxu0 0
    %354 = vmatpush1.bf16.msra.mxu0 0
    %355 = vmatprep.subr.bf16.mxu0 0
    %356 = vmatpush1.bf16.msra.mxu0 0
    %357 = vmatprep.subr.bf16.mxu0 0
    %358 = vmatpush1.bf16.msra.mxu0 0
    %359 = vmatprep.subr.bf16.mxu0 0
    %360 = vmatpush1.bf16.msra.mxu0 0
    %361 = vmatprep.subr.bf16.mxu0 0
    %362 = vmatpush1.bf16.msra.mxu0 0
    %363 = vmatprep.subr.bf16.mxu0 0
    %364 = vmatpush1.bf16.msra.mxu0 0
    %365 = vmatprep.subr.bf16.mxu0 0
    %366 = vmatpush1.bf16.msra.mxu0 0
    %367 = vmatprep.subr.bf16.mxu0 0
    %368 = vmatpush1.bf16.msra.mxu0 0
    %369 = vmatprep.subr.bf16.mxu0 0
    %370 = vmatpush1.bf16.msra.mxu0 0
    %371 = vmatprep.subr.bf16.mxu0 0
    %372 = vmatpush1.bf16.msra.mxu0 0
    %373 = vmatprep.subr.bf16.mxu0 0
    %374 = vmatpush1.bf16.msra.mxu0 0
    %375 = vmatprep.subr.bf16.mxu0 0
    %376 = vmatpush1.bf16.msra.mxu0 0
    %377 = vmatprep.subr.bf16.mxu0 0
    %378 = vmatpush1.bf16.msra.mxu0 0
    %379 = vmatprep.subr.bf16.mxu0 0
    %380 = vmatpush1.bf16.msra.mxu0 0
    %381 = vmatprep.mubr.bf16.mxu0 0
    %382 = vmatmul.mubr.bf16.gmra.mrb[0].mxu0 %v347
    %v383 = vpop.f32.mrb[0].mxu0
    %v384 = vadd.f32 0.0, %v383
    %v385 = vpop.f32.mrb[0].mxu0
    %v386 = vpop.f32.mrb[0].mxu0
    %v387 = vpop.f32.mrb[0].mxu0
    %388 = vdwg.mxu0
    %v389 = vmul.f32 %v384, 0.16666667
    %v390 = vrot.slane %v43, 1
    %v391 = vrot.slane %v44, 1
    %v392 = vrot.slane %v45, 1
    %v393 = vrot.slane %v46, 1
    %v394 = vsel %vm52, %v392, %v393
    %v395 = vsel %vm52, %v391, %v392
    %v396 = vsel %vm52, %v390, %v391
    %v397 = vsel %vm52, %v393, %v390
    %v398 = vrot.slane %v43, 2
    %v399 = vrot.slane %v44, 2
    %v400 = vrot.slane %v45, 2
    %v401 = vrot.slane %v46, 2
    %v402 = vsel %vm57, %v400, %v401
    %v403 = vsel %vm57, %v399, %v400
    %v404 = vsel %vm57, %v398, %v399
    %v405 = vsel %vm57, %v401, %v398
    %v406 = vpack.c.bf16 %v44, %v43
    %v407 = vpack.c.bf16 %v395, %v396
    %v408 = vpack.c.bf16 %v403, %v404
    %v409 = vpack.c.bf16 %v46, %v45
    %v410 = vpack.c.bf16 %v397, %v394
    %v411 = vpack.c.bf16 %v405, %v402
    %v412 = vld [vmem:[#allocation2 + $0xc0] sm:$0xf]
    %v413 = vld [vmem:[#allocation2 + $0xc4] sm:$0xf]
    %v414 = vld [vmem:[#allocation2 + $0xc8] sm:$0xf]
    %v415 = vld [vmem:[#allocation2 + $0xcc] sm:$0xf]
    %v416 = vld [vmem:[#allocation2 + $0xd0] sm:$0xf]
    %v417 = vld [vmem:[#allocation2 + $0xd4] sm:$0xf]
    %v418 = vld [vmem:[#allocation2 + $0xd8] sm:$0xf]
    %v419 = vld [vmem:[#allocation2 + $0xdc] sm:$0xf]
    %v420 = vld [vmem:[#allocation2 + $0xe0] sm:$0xf]
    %v421 = vld [vmem:[#allocation2 + $0xe4] sm:$0xf]
    %v422 = vld [vmem:[#allocation2 + $0xe8] sm:$0xf]
    %v423 = vld [vmem:[#allocation2 + $0xec] sm:$0xf]
    %v424 = vld [vmem:[#allocation2 + $0xf0] sm:$0xf]
    %v425 = vld [vmem:[#allocation2 + $0xf4] sm:$0xf]
    %v426 = vld [vmem:[#allocation2 + $0xf8] sm:$0xf]
    %v427 = vld [vmem:[#allocation2 + $0xfc] sm:$0xf]
    %v428 = vld [vmem:[#allocation2 + $0x100] sm:$0xf]
    %v429 = vld [vmem:[#allocation2 + $0x104] sm:$0xf]
    %v430 = vld [vmem:[#allocation2 + $0x108] sm:$0xf]
    %v431 = vld [vmem:[#allocation2 + $0x10c] sm:$0xf]
    %v432 = vld [vmem:[#allocation2 + $0x110] sm:$0xf]
    %v433 = vld [vmem:[#allocation2 + $0x114] sm:$0xf]
    %v434 = vld [vmem:[#allocation2 + $0x118] sm:$0xf]
    %v435 = vld [vmem:[#allocation2 + $0x11c] sm:$0xf]
    %v436 = vld [vmem:[#allocation2 + $0x120] sm:$0xf]
    %v437 = vld [vmem:[#allocation2 + $0x124] sm:$0xf]
    %v438 = vld [vmem:[#allocation2 + $0x128] sm:$0xf]
    %v439 = vld [vmem:[#allocation2 + $0x12c] sm:$0xf]
    %v440 = vld [vmem:[#allocation2 + $0x130] sm:$0xf]
    %v441 = vld [vmem:[#allocation2 + $0x134] sm:$0xf]
    %v442 = vld [vmem:[#allocation2 + $0x138] sm:$0xf]
    %v443 = vld [vmem:[#allocation2 + $0x13c] sm:$0xf]
    %v444 = vld [vmem:[#allocation2 + $0x140] sm:$0xf]
    %v445 = vld [vmem:[#allocation2 + $0x144] sm:$0xf]
    %v446 = vld [vmem:[#allocation2 + $0x148] sm:$0xf]
    %v447 = vld [vmem:[#allocation2 + $0x14c] sm:$0xf]
    %v448 = vld [vmem:[#allocation2 + $0x150] sm:$0xf]
    %v449 = vld [vmem:[#allocation2 + $0x154] sm:$0xf]
    %v450 = vld [vmem:[#allocation2 + $0x158] sm:$0xf]
    %v451 = vld [vmem:[#allocation2 + $0x15c] sm:$0xf]
    %v452 = vld [vmem:[#allocation2 + $0x160] sm:$0xf]
    %v453 = vld [vmem:[#allocation2 + $0x164] sm:$0xf]
    %v454 = vld [vmem:[#allocation2 + $0x168] sm:$0xf]
    %v455 = vld [vmem:[#allocation2 + $0x16c] sm:$0xf]
    %v456 = vld [vmem:[#allocation2 + $0x170] sm:$0xf]
    %v457 = vld [vmem:[#allocation2 + $0x174] sm:$0xf]
    %v458 = vld [vmem:[#allocation2 + $0x178] sm:$0xf]
    %v459 = vld [vmem:[#allocation2 + $0x17c] sm:$0xf]
    %v460 = vlaneseq
    %v461 = vshrl.u32 %v460, 7
    %v462 = vsub.s32 0, %v461
    %v463 = vrot.slane %v30, %v462
    %v512 = vunpack.c.l.b16 %v412
    %v513 = vunpack.c.l.b16 %v413
    %v514 = vunpack.c.l.b16 %v414
    %v515 = vunpack.c.l.b16 %v415
    %v516 = vunpack.c.l.b16 %v416
    %v517 = vunpack.c.l.b16 %v417
    %v518 = vunpack.c.l.b16 %v418
    %v519 = vunpack.c.l.b16 %v419
    %v520 = vunpack.c.l.b16 %v420
    %v521 = vunpack.c.l.b16 %v421
    %v522 = vunpack.c.l.b16 %v422
    %v523 = vunpack.c.l.b16 %v423
    %v524 = vunpack.c.l.b16 %v424
    %v525 = vunpack.c.l.b16 %v425
    %v526 = vunpack.c.l.b16 %v426
    %v527 = vunpack.c.l.b16 %v427
    %v528 = vunpack.c.l.b16 %v428
    %v529 = vunpack.c.l.b16 %v429
    %v530 = vunpack.c.l.b16 %v430
    %v531 = vunpack.c.l.b16 %v431
    %v532 = vunpack.c.l.b16 %v432
    %v533 = vunpack.c.l.b16 %v433
    %v534 = vunpack.c.l.b16 %v434
    %v535 = vunpack.c.l.b16 %v435
    %v536 = vunpack.c.l.b16 %v436
    %v537 = vunpack.c.l.b16 %v437
    %v538 = vunpack.c.l.b16 %v438
    %v539 = vunpack.c.l.b16 %v439
    %v540 = vunpack.c.l.b16 %v440
    %v541 = vunpack.c.l.b16 %v441
    %v542 = vunpack.c.l.b16 %v442
    %v543 = vunpack.c.l.b16 %v443
    %v544 = vunpack.c.l.b16 %v444
    %v545 = vunpack.c.l.b16 %v445
    %v546 = vunpack.c.l.b16 %v446
    %v547 = vunpack.c.l.b16 %v447
    %v548 = vunpack.c.l.b16 %v448
    %v549 = vunpack.c.l.b16 %v449
    %v550 = vunpack.c.l.b16 %v450
    %v551 = vunpack.c.l.b16 %v451
    %v552 = vunpack.c.l.b16 %v452
    %v553 = vunpack.c.l.b16 %v453
    %v554 = vunpack.c.l.b16 %v454
    %v555 = vunpack.c.l.b16 %v455
    %v556 = vunpack.c.l.b16 %v456
    %v557 = vunpack.c.l.b16 %v457
    %v558 = vunpack.c.l.b16 %v458
    %v559 = vunpack.c.l.b16 %v459
    %v560 = vpack.c.b16 %v513, %v512
    %v561 = vpack.c.b16 %v515, %v514
    %v562 = vpack.c.b16 %v517, %v516
    %v563 = vpack.c.b16 %v519, %v518
    %v564 = vpack.c.b16 %v521, %v520
    %v565 = vpack.c.b16 %v523, %v522
    %v566 = vpack.c.b16 %v525, %v524
    %v567 = vpack.c.b16 %v527, %v526
    %v568 = vpack.c.b16 %v529, %v528
    %v569 = vpack.c.b16 %v531, %v530
    %v570 = vpack.c.b16 %v533, %v532
    %v571 = vpack.c.b16 %v535, %v534
    %v572 = vpack.c.b16 %v537, %v536
    %v573 = vpack.c.b16 %v539, %v538
    %v574 = vpack.c.b16 %v541, %v540
    %v575 = vpack.c.b16 %v543, %v542
    %v576 = vpack.c.b16 %v545, %v544
    %v577 = vpack.c.b16 %v547, %v546
    %v578 = vpack.c.b16 %v549, %v548
    %v579 = vpack.c.b16 %v551, %v550
    %v580 = vpack.c.b16 %v553, %v552
    %v581 = vpack.c.b16 %v555, %v554
    %v582 = vpack.c.b16 %v557, %v556
    %v583 = vpack.c.b16 %v559, %v558
    %608 = vmatprep.subr.bf16.mxu0 0
    %609 = vmatpush1.bf16.msra.mxu0 %v560
    %610 = vmatprep.subr.bf16.mxu0 0
    %611 = vmatpush1.bf16.msra.mxu0 %v561
    %612 = vmatprep.subr.bf16.mxu0 0
    %613 = vmatpush1.bf16.msra.mxu0 %v562
    %614 = vmatprep.subr.bf16.mxu0 0
    %615 = vmatpush1.bf16.msra.mxu0 %v563
    %616 = vmatprep.subr.bf16.mxu0 0
    %617 = vmatpush1.bf16.msra.mxu0 %v564
    %618 = vmatprep.subr.bf16.mxu0 0
    %619 = vmatpush1.bf16.msra.mxu0 %v565
    %620 = vmatprep.subr.bf16.mxu0 0
    %621 = vmatpush1.bf16.msra.mxu0 %v566
    %622 = vmatprep.subr.bf16.mxu0 0
    %623 = vmatpush1.bf16.msra.mxu0 %v567
    %624 = vmatprep.subr.bf16.mxu0 0
    %625 = vmatpush1.bf16.msra.mxu0 %v568
    %626 = vmatprep.subr.bf16.mxu0 0
    %627 = vmatpush1.bf16.msra.mxu0 %v569
    %628 = vmatprep.subr.bf16.mxu0 0
    %629 = vmatpush1.bf16.msra.mxu0 %v570
    %630 = vmatprep.subr.bf16.mxu0 0
    %631 = vmatpush1.bf16.msra.mxu0 %v571
    %632 = vmatprep.subr.bf16.mxu0 0
    %633 = vmatpush1.bf16.msra.mxu0 %v572
    %634 = vmatprep.subr.bf16.mxu0 0
    %635 = vmatpush1.bf16.msra.mxu0 %v573
    %636 = vmatprep.subr.bf16.mxu0 0
    %637 = vmatpush1.bf16.msra.mxu0 %v574
    %638 = vmatprep.subr.bf16.mxu0 0
    %639 = vmatpush1.bf16.msra.mxu0 %v575
    %640 = vmatprep.mubr.bf16.mxu0 %v407
    %641 = vmatmul.mubr.bf16.gmra.mrb[0].mxu0 %v406
    %v642 = vpop.f32.mrb[0].mxu0
    %v643 = vadd.f32 %v463, %v642
    %v644 = vpop.f32.mrb[0].mxu0
    %v645 = vpop.f32.mrb[0].mxu0
    %v646 = vadd.f32 %v463, %v645
    %v647 = vpop.f32.mrb[0].mxu0
    %648 = vmatprep.mubr.bf16.mxu0 %v410
    %649 = vmatmul.mubr.bf16.gmra.mrb[0].mxu0 %v409
    %v650 = vpop.f32.mrb[0].mxu0
    %v651 = vadd.f32 %v463, %v650
    %v652 = vpop.f32.mrb[0].mxu0
    %v653 = vpop.f32.mrb[0].mxu0
    %v654 = vadd.f32 %v463, %v653
    %v655 = vpop.f32.mrb[0].mxu0
    %656 = vdwg.mxu0
    %657 = vmatprep.subr.bf16.mxu0 0
    %658 = vmatpush1.bf16.msra.mxu0 %v576
    %659 = vmatprep.subr.bf16.mxu0 0
    %660 = vmatpush1.bf16.msra.mxu0 %v577
    %661 = vmatprep.subr.bf16.mxu0 0
    %662 = vmatpush1.bf16.msra.mxu0 %v578
    %663 = vmatprep.subr.bf16.mxu0 0
    %664 = vmatpush1.bf16.msra.mxu0 %v579
    %665 = vmatprep.subr.bf16.mxu0 0
    %666 = vmatpush1.bf16.msra.mxu0 %v580
    %667 = vmatprep.subr.bf16.mxu0 0
    %668 = vmatpush1.bf16.msra.mxu0 %v581
    %669 = vmatprep.subr.bf16.mxu0 0
    %670 = vmatpush1.bf16.msra.mxu0 %v582
    %671 = vmatprep.subr.bf16.mxu0 0
    %672 = vmatpush1.bf16.msra.mxu0 %v583
    %673 = vmatprep.subr.bf16.mxu0 0
    %674 = vmatpush1.bf16.msra.mxu0 0
    %675 = vmatprep.subr.bf16.mxu0 0
    %676 = vmatpush1.bf16.msra.mxu0 0
    %677 = vmatprep.subr.bf16.mxu0 0
    %678 = vmatpush1.bf16.msra.mxu0 0
    %679 = vmatprep.subr.bf16.mxu0 0
    %680 = vmatpush1.bf16.msra.mxu0 0
    %681 = vmatprep.subr.bf16.mxu0 0
    %682 = vmatpush1.bf16.msra.mxu0 0
    %683 = vmatprep.subr.bf16.mxu0 0
    %684 = vmatpush1.bf16.msra.mxu0 0
    %685 = vmatprep.subr.bf16.mxu0 0
    %686 = vmatpush1.bf16.msra.mxu0 0
    %687 = vmatprep.subr.bf16.mxu0 0
    %688 = vmatpush1.bf16.msra.mxu0 0
    %689 = vmatprep.mubr.bf16.mxu0 0
    %690 = vmatmul.mubr.bf16.gmra.mrb[0].mxu0 %v408
    %v691 = vpop.f32.mrb[0].mxu0
    %v692 = vadd.f32 %v643, %v691
    %v693 = vpop.f32.mrb[0].mxu0
    %v694 = vpop.f32.mrb[0].mxu0
    %v695 = vadd.f32 %v646, %v694
    %v696 = vpop.f32.mrb[0].mxu0
    %697 = vmatprep.mubr.bf16.mxu0 0
    %698 = vmatmul.mubr.bf16.gmra.mrb[0].mxu0 %v411
    %v699 = vpop.f32.mrb[0].mxu0
    %v700 = vadd.f32 %v651, %v699
    %v701 = vpop.f32.mrb[0].mxu0
    %v702 = vpop.f32.mrb[0].mxu0
    %v703 = vadd.f32 %v654, %v702
    %v704 = vpop.f32.mrb[0].mxu0
    %705 = vdwg.mxu0
    %v706 = vmax.f32 %v692, 0.0
    %v707 = vmax.f32 %v695, 0.0
    %v708 = vmax.f32 %v700, 0.0
    %v709 = vmax.f32 %v703, 0.0
    %v710 = vrot.slane %v706, 1
    %v711 = vrot.slane %v707, 1
    %v712 = vrot.slane %v708, 1
    %v713 = vrot.slane %v709, 1
    %v714 = vsel %vm52, %v712, %v713
    %v715 = vsel %vm52, %v711, %v712
    %v716 = vsel %vm52, %v710, %v711
    %v717 = vsel %vm52, %v713, %v710
    %v718 = vrot.slane %v706, 2
    %v719 = vrot.slane %v707, 2
    %v720 = vrot.slane %v708, 2
    %v721 = vrot.slane %v709, 2
    %v722 = vsel %vm57, %v720, %v721
    %v723 = vsel %vm57, %v719, %v720
    %v724 = vsel %vm57, %v718, %v719
    %v725 = vsel %vm57, %v721, %v718
    %v726 = vpack.c.bf16 %v707, %v706
    %v727 = vpack.c.bf16 %v715, %v716
    %v728 = vpack.c.bf16 %v723, %v724
    %v729 = vpack.c.bf16 %v709, %v708
    %v730 = vpack.c.bf16 %v717, %v714
    %v731 = vpack.c.bf16 %v725, %v722
    %v732 = vld [vmem:[#allocation2 + $0x180] sm:$0xf]
    %v733 = vld [vmem:[#allocation2 + $0x184] sm:$0xf]
    %v734 = vld [vmem:[#allocation2 + $0x188] sm:$0xf]
    %v735 = vld [vmem:[#allocation2 + $0x18c] sm:$0xf]
    %v736 = vld [vmem:[#allocation2 + $0x190] sm:$0xf]
    %v737 = vld [vmem:[#allocation2 + $0x194] sm:$0xf]
    %v738 = vld [vmem:[#allocation2 + $0x198] sm:$0xf]
    %v739 = vld [vmem:[#allocation2 + $0x19c] sm:$0xf]
    %v740 = vld [vmem:[#allocation2 + $0x1a0] sm:$0xf]
    %v741 = vld [vmem:[#allocation2 + $0x1a4] sm:$0xf]
    %v742 = vld [vmem:[#allocation2 + $0x1a8] sm:$0xf]
    %v743 = vld [vmem:[#allocation2 + $0x1ac] sm:$0xf]
    %v744 = vld [vmem:[#allocation2 + $0x1b0] sm:$0xf]
    %v745 = vld [vmem:[#allocation2 + $0x1b4] sm:$0xf]
    %v746 = vld [vmem:[#allocation2 + $0x1b8] sm:$0xf]
    %v747 = vld [vmem:[#allocation2 + $0x1bc] sm:$0xf]
    %v748 = vld [vmem:[#allocation2 + $0x1c0] sm:$0xf]
    %v749 = vld [vmem:[#allocation2 + $0x1c4] sm:$0xf]
    %v750 = vld [vmem:[#allocation2 + $0x1c8] sm:$0xf]
    %v751 = vld [vmem:[#allocation2 + $0x1cc] sm:$0xf]
    %v752 = vld [vmem:[#allocation2 + $0x1d0] sm:$0xf]
    %v753 = vld [vmem:[#allocation2 + $0x1d4] sm:$0xf]
    %v754 = vld [vmem:[#allocation2 + $0x1d8] sm:$0xf]
    %v755 = vld [vmem:[#allocation2 + $0x1dc] sm:$0xf]
    %v756 = vld [vmem:[#allocation2 + $0x1e0] sm:$0xf]
    %v757 = vld [vmem:[#allocation2 + $0x1e4] sm:$0xf]
    %v758 = vld [vmem:[#allocation2 + $0x1e8] sm:$0xf]
    %v759 = vld [vmem:[#allocation2 + $0x1ec] sm:$0xf]
    %v760 = vld [vmem:[#allocation2 + $0x1f0] sm:$0xf]
    %v761 = vld [vmem:[#allocation2 + $0x1f4] sm:$0xf]
    %v762 = vld [vmem:[#allocation2 + $0x1f8] sm:$0xf]
    %v763 = vld [vmem:[#allocation2 + $0x1fc] sm:$0xf]
    %v764 = vld [vmem:[#allocation2 + $0x200] sm:$0xf]
    %v765 = vld [vmem:[#allocation2 + $0x204] sm:$0xf]
    %v766 = vld [vmem:[#allocation2 + $0x208] sm:$0xf]
    %v767 = vld [vmem:[#allocation2 + $0x20c] sm:$0xf]
    %v768 = vld [vmem:[#allocation2 + $0x210] sm:$0xf]
    %v769 = vld [vmem:[#allocation2 + $0x214] sm:$0xf]
    %v770 = vld [vmem:[#allocation2 + $0x218] sm:$0xf]
    %v771 = vld [vmem:[#allocation2 + $0x21c] sm:$0xf]
    %v772 = vld [vmem:[#allocation2 + $0x220] sm:$0xf]
    %v773 = vld [vmem:[#allocation2 + $0x224] sm:$0xf]
    %v774 = vld [vmem:[#allocation2 + $0x228] sm:$0xf]
    %v775 = vld [vmem:[#allocation2 + $0x22c] sm:$0xf]
    %v776 = vld [vmem:[#allocation2 + $0x230] sm:$0xf]
    %v777 = vld [vmem:[#allocation2 + $0x234] sm:$0xf]
    %v778 = vld [vmem:[#allocation2 + $0x238] sm:$0xf]
    %v779 = vld [vmem:[#allocation2 + $0x23c] sm:$0xf]
    %v780 = vlaneseq
    %v781 = vshrl.u32 %v780, 7
    %v782 = vsub.s32 0, %v781
    %v783 = vrot.slane %v31, %v782
    %v832 = vunpack.c.l.b16 %v732
    %v833 = vunpack.c.l.b16 %v733
    %v834 = vunpack.c.l.b16 %v734
    %v835 = vunpack.c.l.b16 %v735
    %v836 = vunpack.c.l.b16 %v736
    %v837 = vunpack.c.l.b16 %v737
    %v838 = vunpack.c.l.b16 %v738
    %v839 = vunpack.c.l.b16 %v739
    %v840 = vunpack.c.l.b16 %v740
    %v841 = vunpack.c.l.b16 %v741
    %v842 = vunpack.c.l.b16 %v742
    %v843 = vunpack.c.l.b16 %v743
    %v844 = vunpack.c.l.b16 %v744
    %v845 = vunpack.c.l.b16 %v745
    %v846 = vunpack.c.l.b16 %v746
    %v847 = vunpack.c.l.b16 %v747
    %v848 = vunpack.c.l.b16 %v748
    %v849 = vunpack.c.l.b16 %v749
    %v850 = vunpack.c.l.b16 %v750
    %v851 = vunpack.c.l.b16 %v751
    %v852 = vunpack.c.l.b16 %v752
    %v853 = vunpack.c.l.b16 %v753
    %v854 = vunpack.c.l.b16 %v754
    %v855 = vunpack.c.l.b16 %v755
    %v856 = vunpack.c.l.b16 %v756
    %v857 = vunpack.c.l.b16 %v757
    %v858 = vunpack.c.l.b16 %v758
    %v859 = vunpack.c.l.b16 %v759
    %v860 = vunpack.c.l.b16 %v760
    %v861 = vunpack.c.l.b16 %v761
    %v862 = vunpack.c.l.b16 %v762
    %v863 = vunpack.c.l.b16 %v763
    %v864 = vunpack.c.l.b16 %v764
    %v865 = vunpack.c.l.b16 %v765
    %v866 = vunpack.c.l.b16 %v766
    %v867 = vunpack.c.l.b16 %v767
    %v868 = vunpack.c.l.b16 %v768
    %v869 = vunpack.c.l.b16 %v769
    %v870 = vunpack.c.l.b16 %v770
    %v871 = vunpack.c.l.b16 %v771
    %v872 = vunpack.c.l.b16 %v772
    %v873 = vunpack.c.l.b16 %v773
    %v874 = vunpack.c.l.b16 %v774
    %v875 = vunpack.c.l.b16 %v775
    %v876 = vunpack.c.l.b16 %v776
    %v877 = vunpack.c.l.b16 %v777
    %v878 = vunpack.c.l.b16 %v778
    %v879 = vunpack.c.l.b16 %v779
    %v880 = vpack.c.b16 %v833, %v832
    %v881 = vpack.c.b16 %v835, %v834
    %v882 = vpack.c.b16 %v837, %v836
    %v883 = vpack.c.b16 %v839, %v838
    %v884 = vpack.c.b16 %v841, %v840
    %v885 = vpack.c.b16 %v843, %v842
    %v886 = vpack.c.b16 %v845, %v844
    %v887 = vpack.c.b16 %v847, %v846
    %v888 = vpack.c.b16 %v849, %v848
    %v889 = vpack.c.b16 %v851, %v850
    %v890 = vpack.c.b16 %v853, %v852
    %v891 = vpack.c.b16 %v855, %v854
    %v892 = vpack.c.b16 %v857, %v856
    %v893 = vpack.c.b16 %v859, %v858
    %v894 = vpack.c.b16 %v861, %v860
    %v895 = vpack.c.b16 %v863, %v862
    %v896 = vpack.c.b16 %v865, %v864
    %v897 = vpack.c.b16 %v867, %v866
    %v898 = vpack.c.b16 %v869, %v868
    %v899 = vpack.c.b16 %v871, %v870
    %v900 = vpack.c.b16 %v873, %v872
    %v901 = vpack.c.b16 %v875, %v874
    %v902 = vpack.c.b16 %v877, %v876
    %v903 = vpack.c.b16 %v879, %v878
    %928 = vmatprep.subr.bf16.mxu0 0
    %929 = vmatpush1.bf16.msra.mxu0 %v880
    %930 = vmatprep.subr.bf16.mxu0 0
    %931 = vmatpush1.bf16.msra.mxu0 %v881
    %932 = vmatprep.subr.bf16.mxu0 0
    %933 = vmatpush1.bf16.msra.mxu0 %v882
    %934 = vmatprep.subr.bf16.mxu0 0
    %935 = vmatpush1.bf16.msra.mxu0 %v883
    %936 = vmatprep.subr.bf16.mxu0 0
    %937 = vmatpush1.bf16.msra.mxu0 %v884
    %938 = vmatprep.subr.bf16.mxu0 0
    %939 = vmatpush1.bf16.msra.mxu0 %v885
    %940 = vmatprep.subr.bf16.mxu0 0
    %941 = vmatpush1.bf16.msra.mxu0 %v886
    %942 = vmatprep.subr.bf16.mxu0 0
    %943 = vmatpush1.bf16.msra.mxu0 %v887
    %944 = vmatprep.subr.bf16.mxu0 0
    %945 = vmatpush1.bf16.msra.mxu0 %v888
    %946 = vmatprep.subr.bf16.mxu0 0
    %947 = vmatpush1.bf16.msra.mxu0 %v889
    %948 = vmatprep.subr.bf16.mxu0 0
    %949 = vmatpush1.bf16.msra.mxu0 %v890
    %950 = vmatprep.subr.bf16.mxu0 0
    %951 = vmatpush1.bf16.msra.mxu0 %v891
    %952 = vmatprep.subr.bf16.mxu0 0
    %953 = vmatpush1.bf16.msra.mxu0 %v892
    %954 = vmatprep.subr.bf16.mxu0 0
    %955 = vmatpush1.bf16.msra.mxu0 %v893
    %956 = vmatprep.subr.bf16.mxu0 0
    %957 = vmatpush1.bf16.msra.mxu0 %v894
    %958 = vmatprep.subr.bf16.mxu0 0
    %959 = vmatpush1.bf16.msra.mxu0 %v895
    %960 = vmatprep.mubr.bf16.mxu0 %v727
    %961 = vmatmul.mubr.bf16.gmra.mrb[0].mxu0 %v726
    %v962 = vpop.f32.mrb[0].mxu0
    %v963 = vadd.f32 %v783, %v962
    %v964 = vpop.f32.mrb[0].mxu0
    %v965 = vpop.f32.mrb[0].mxu0
    %v966 = vadd.f32 %v783, %v965
    %v967 = vpop.f32.mrb[0].mxu0
    %968 = vmatprep.mubr.bf16.mxu0 %v730
    %969 = vmatmul.mubr.bf16.gmra.mrb[0].mxu0 %v729
    %v970 = vpop.f32.mrb[0].mxu0
    %v971 = vadd.f32 %v783, %v970
    %v972 = vpop.f32.mrb[0].mxu0
    %v973 = vpop.f32.mrb[0].mxu0
    %v974 = vadd.f32 %v783, %v973
    %v975 = vpop.f32.mrb[0].mxu0
    %976 = vdwg.mxu0
    %977 = vmatprep.subr.bf16.mxu0 0
    %978 = vmatpush1.bf16.msra.mxu0 %v896
    %979 = vmatprep.subr.bf16.mxu0 0
    %980 = vmatpush1.bf16.msra.mxu0 %v897
    %981 = vmatprep.subr.bf16.mxu0 0
    %982 = vmatpush1.bf16.msra.mxu0 %v898
    %983 = vmatprep.subr.bf16.mxu0 0
    %984 = vmatpush1.bf16.msra.mxu0 %v899
    %985 = vmatprep.subr.bf16.mxu0 0
    %986 = vmatpush1.bf16.msra.mxu0 %v900
    %987 = vmatprep.subr.bf16.mxu0 0
    %988 = vmatpush1.bf16.msra.mxu0 %v901
    %989 = vmatprep.subr.bf16.mxu0 0
    %990 = vmatpush1.bf16.msra.mxu0 %v902
    %991 = vmatprep.subr.bf16.mxu0 0
    %992 = vmatpush1.bf16.msra.mxu0 %v903
    %993 = vmatprep.subr.bf16.mxu0 0
    %994 = vmatpush1.bf16.msra.mxu0 0
    %995 = vmatprep.subr.bf16.mxu0 0
    %996 = vmatpush1.bf16.msra.mxu0 0
    %997 = vmatprep.subr.bf16.mxu0 0
    %998 = vmatpush1.bf16.msra.mxu0 0
    %999 = vmatprep.subr.bf16.mxu0 0
    %1000 = vmatpush1.bf16.msra.mxu0 0
    %1001 = vmatprep.subr.bf16.mxu0 0
    %1002 = vmatpush1.bf16.msra.mxu0 0
    %1003 = vmatprep.subr.bf16.mxu0 0
    %1004 = vmatpush1.bf16.msra.mxu0 0
    %1005 = vmatprep.subr.bf16.mxu0 0
    %1006 = vmatpush1.bf16.msra.mxu0 0
    %1007 = vmatprep.subr.bf16.mxu0 0
    %1008 = vmatpush1.bf16.msra.mxu0 0
    %1009 = vmatprep.mubr.bf16.mxu0 0
    %1010 = vmatmul.mubr.bf16.gmra.mrb[0].mxu0 %v728
    %v1011 = vpop.f32.mrb[0].mxu0
    %v1012 = vadd.f32 %v963, %v1011
    %v1013 = vpop.f32.mrb[0].mxu0
    %v1014 = vpop.f32.mrb[0].mxu0
    %v1015 = vadd.f32 %v966, %v1014
    %v1016 = vpop.f32.mrb[0].mxu0
    %1017 = vmatprep.mubr.bf16.mxu0 0
    %1018 = vmatmul.mubr.bf16.gmra.mrb[0].mxu0 %v731
    %v1019 = vpop.f32.mrb[0].mxu0
    %v1020 = vadd.f32 %v971, %v1019
    %v1021 = vpop.f32.mrb[0].mxu0
    %v1022 = vpop.f32.mrb[0].mxu0
    %v1023 = vadd.f32 %v974, %v1022
    %v1024 = vpop.f32.mrb[0].mxu0
    %1025 = vdwg.mxu0
    %v1026 = vmax.f32 %v1012, 0.0
    %v1027 = vmax.f32 %v1015, 0.0
    %v1028 = vmax.f32 %v1020, 0.0
    %v1029 = vmax.f32 %v1023, 0.0
    %1031 = vset.pattern.permute.xlu0 0
    %1032 = vperm.xlu0 %1031, %v37
    %v1033 = vpop.permute.xlu0 %1032
    %1036 = vset.pattern.permute.xlu0 0
    %1037 = vperm.xlu0 %1036, %v38
    %v1038 = vpop.permute.xlu0 %1037
    %1041 = vset.pattern.permute.xlu0 0
    %1042 = vperm.xlu0 %1041, %v39
    %v1043 = vpop.permute.xlu0 %1042
    %1046 = vset.pattern.permute.xlu0 0
    %1047 = vperm.xlu0 %1046, %v40
    %v1048 = vpop.permute.xlu0 %1047
    %v1050 = vmul.f32 %v1026, %v1033
    %v1051 = vmul.f32 %v1027, %v1038
    %v1052 = vmul.f32 %v1028, %v1043
    %v1053 = vmul.f32 %v1029, %v1048
    %v1054 = vadd.f32 %v1050, %v1051
    %v1055 = vadd.f32 %v1054, %v1052
    %v1056 = vadd.f32 %v1055, %v1053
    %v1057 = vrot.slane %v1056, 4
    %v1058 = vadd.f32 %v1056, %v1057
    %v1059 = vrot.slane %v1058, 2
    %v1060 = vadd.f32 %v1058, %v1059
    %v1061 = vrot.slane %v1060, 1
    %v1062 = vadd.f32 %v1060, %v1061
    %v1063 = vmul.f32 %v1050, %v1026
    %v1064 = vmul.f32 %v1051, %v1027
    %v1065 = vmul.f32 %v1052, %v1028
    %v1066 = vmul.f32 %v1053, %v1029
    %v1067 = vadd.f32 %v1063, %v1064
    %v1068 = vadd.f32 %v1067, %v1065
    %v1069 = vadd.f32 %v1068, %v1066
    %v1070 = vrot.slane %v1069, 4
    %v1071 = vadd.f32 %v1069, %v1070
    %v1072 = vrot.slane %v1071, 2
    %v1073 = vadd.f32 %v1071, %v1072
    %v1074 = vrot.slane %v1073, 1
    %v1075 = vadd.f32 %v1073, %v1074
    %v1076 = vsub.f32 %v1026, %v1062
    %v1077 = vsub.f32 %v1027, %v1062
    %v1078 = vsub.f32 %v1028, %v1062
    %v1079 = vsub.f32 %v1029, %v1062
    %v1080 = vmul.f32 %v1062, %v1062
    %v1081 = vsub.f32 %v1075, %v1080
    %v1082 = vadd.f32 %v1081, 1e-05
    %v1083 = vrsqrt.pop %v1082
    %v1084 = vmul.f32 %v1076, %v1083
    %v1085 = vmul.f32 %v1077, %v1083
    %v1086 = vmul.f32 %v1078, %v1083
    %v1087 = vmul.f32 %v1079, %v1083
    %v1088 = vlaneseq
    %v1089 = vshrl.u32 %v1088, 7
    %v1090 = vsub.s32 0, %v1089
    %v1091 = vrot.slane %v32, %v1090
    %v1092 = vmul.f32 %v1084, %v1091
    %v1093 = vmul.f32 %v1085, %v1091
    %v1094 = vmul.f32 %v1086, %v1091
    %v1095 = vmul.f32 %v1087, %v1091
    %v1096 = vlaneseq
    %v1097 = vshrl.u32 %v1096, 7
    %v1098 = vsub.s32 0, %v1097
    %v1099 = vrot.slane %v33, %v1098
    %v1100 = vadd.f32 %v1092, %v1099
    %v1101 = vadd.f32 %v1093, %v1099
    %v1102 = vadd.f32 %v1094, %v1099
    %v1103 = vadd.f32 %v1095, %v1099
    %v1104 = vrot.slane %v1100, 1
    %v1105 = vrot.slane %v1101, 1
    %v1106 = vrot.slane %v1102, 1
    %v1107 = vrot.slane %v1103, 1
    %v1108 = vsel %vm52, %v1106, %v1107
    %v1109 = vsel %vm52, %v1105, %v1106
    %v1110 = vsel %vm52, %v1104, %v1105
    %v1111 = vsel %vm52, %v1107, %v1104
    %v1112 = vrot.slane %v1100, 2
    %v1113 = vrot.slane %v1101, 2
    %v1114 = vrot.slane %v1102, 2
    %v1115 = vrot.slane %v1103, 2
    %v1116 = vsel %vm57, %v1114, %v1115
    %v1117 = vsel %vm57, %v1113, %v1114
    %v1118 = vsel %vm57, %v1112, %v1113
    %v1119 = vsel %vm57, %v1115, %v1112
    %v1120 = vpack.c.bf16 %v1101, %v1100
    %v1121 = vpack.c.bf16 %v1109, %v1110
    %v1122 = vpack.c.bf16 %v1117, %v1118
    %v1123 = vpack.c.bf16 %v1103, %v1102
    %v1124 = vpack.c.bf16 %v1111, %v1108
    %v1125 = vpack.c.bf16 %v1119, %v1116
    %v1126 = vld [vmem:[#allocation2 + $0x240] sm:$0xf]
    %v1127 = vld [vmem:[#allocation2 + $0x244] sm:$0xf]
    %v1128 = vld [vmem:[#allocation2 + $0x248] sm:$0xf]
    %v1129 = vld [vmem:[#allocation2 + $0x24c] sm:$0xf]
    %v1130 = vld [vmem:[#allocation2 + $0x250] sm:$0xf]
    %v1131 = vld [vmem:[#allocation2 + $0x254] sm:$0xf]
    %v1132 = vld [vmem:[#allocation2 + $0x258] sm:$0xf]
    %v1133 = vld [vmem:[#allocation2 + $0x25c] sm:$0xf]
    %v1134 = vld [vmem:[#allocation2 + $0x260] sm:$0xf]
    %v1135 = vld [vmem:[#allocation2 + $0x264] sm:$0xf]
    %v1136 = vld [vmem:[#allocation2 + $0x268] sm:$0xf]
    %v1137 = vld [vmem:[#allocation2 + $0x26c] sm:$0xf]
    %v1138 = vld [vmem:[#allocation2 + $0x270] sm:$0xf]
    %v1139 = vld [vmem:[#allocation2 + $0x274] sm:$0xf]
    %v1140 = vld [vmem:[#allocation2 + $0x278] sm:$0xf]
    %v1141 = vld [vmem:[#allocation2 + $0x27c] sm:$0xf]
    %v1142 = vld [vmem:[#allocation2 + $0x280] sm:$0xf]
    %v1143 = vld [vmem:[#allocation2 + $0x284] sm:$0xf]
    %v1144 = vld [vmem:[#allocation2 + $0x288] sm:$0xf]
    %v1145 = vld [vmem:[#allocation2 + $0x28c] sm:$0xf]
    %v1146 = vld [vmem:[#allocation2 + $0x290] sm:$0xf]
    %v1147 = vld [vmem:[#allocation2 + $0x294] sm:$0xf]
    %v1148 = vld [vmem:[#allocation2 + $0x298] sm:$0xf]
    %v1149 = vld [vmem:[#allocation2 + $0x29c] sm:$0xf]
    %v1150 = vld [vmem:[#allocation2 + $0x2a0] sm:$0xf]
    %v1151 = vld [vmem:[#allocation2 + $0x2a4] sm:$0xf]
    %v1152 = vld [vmem:[#allocation2 + $0x2a8] sm:$0xf]
    %v1153 = vld [vmem:[#allocation2 + $0x2ac] sm:$0xf]
    %v1154 = vld [vmem:[#allocation2 + $0x2b0] sm:$0xf]
    %v1155 = vld [vmem:[#allocation2 + $0x2b4] sm:$0xf]
    %v1156 = vld [vmem:[#allocation2 + $0x2b8] sm:$0xf]
    %v1157 = vld [vmem:[#allocation2 + $0x2bc] sm:$0xf]
    %v1158 = vld [vmem:[#allocation2 + $0x2c0] sm:$0xf]
    %v1159 = vld [vmem:[#allocation2 + $0x2c4] sm:$0xf]
    %v1160 = vld [vmem:[#allocation2 + $0x2c8] sm:$0xf]
    %v1161 = vld [vmem:[#allocation2 + $0x2cc] sm:$0xf]
    %v1162 = vld [vmem:[#allocation2 + $0x2d0] sm:$0xf]
    %v1163 = vld [vmem:[#allocation2 + $0x2d4] sm:$0xf]
    %v1164 = vld [vmem:[#allocation2 + $0x2d8] sm:$0xf]
    %v1165 = vld [vmem:[#allocation2 + $0x2dc] sm:$0xf]
    %v1166 = vld [vmem:[#allocation2 + $0x2e0] sm:$0xf]
    %v1167 = vld [vmem:[#allocation2 + $0x2e4] sm:$0xf]
    %v1168 = vld [vmem:[#allocation2 + $0x2e8] sm:$0xf]
    %v1169 = vld [vmem:[#allocation2 + $0x2ec] sm:$0xf]
    %v1170 = vld [vmem:[#allocation2 + $0x2f0] sm:$0xf]
    %v1171 = vld [vmem:[#allocation2 + $0x2f4] sm:$0xf]
    %v1172 = vld [vmem:[#allocation2 + $0x2f8] sm:$0xf]
    %v1173 = vld [vmem:[#allocation2 + $0x2fc] sm:$0xf]
    %v1174 = vlaneseq
    %v1175 = vshrl.u32 %v1174, 7
    %v1176 = vsub.s32 0, %v1175
    %v1177 = vrot.slane %v34, %v1176
    %v1226 = vunpack.c.l.b16 %v1126
    %v1227 = vunpack.c.l.b16 %v1127
    %v1228 = vunpack.c.l.b16 %v1128
    %v1229 = vunpack.c.l.b16 %v1129
    %v1230 = vunpack.c.l.b16 %v1130
    %v1231 = vunpack.c.l.b16 %v1131
    %v1232 = vunpack.c.l.b16 %v1132
    %v1233 = vunpack.c.l.b16 %v1133
    %v1234 = vunpack.c.l.b16 %v1134
    %v1235 = vunpack.c.l.b16 %v1135
    %v1236 = vunpack.c.l.b16 %v1136
    %v1237 = vunpack.c.l.b16 %v1137
    %v1238 = vunpack.c.l.b16 %v1138
    %v1239 = vunpack.c.l.b16 %v1139
    %v1240 = vunpack.c.l.b16 %v1140
    %v1241 = vunpack.c.l.b16 %v1141
    %v1242 = vunpack.c.l.b16 %v1142
    %v1243 = vunpack.c.l.b16 %v1143
    %v1244 = vunpack.c.l.b16 %v1144
    %v1245 = vunpack.c.l.b16 %v1145
    %v1246 = vunpack.c.l.b16 %v1146
    %v1247 = vunpack.c.l.b16 %v1147
    %v1248 = vunpack.c.l.b16 %v1148
    %v1249 = vunpack.c.l.b16 %v1149
    %v1250 = vunpack.c.l.b16 %v1150
    %v1251 = vunpack.c.l.b16 %v1151
    %v1252 = vunpack.c.l.b16 %v1152
    %v1253 = vunpack.c.l.b16 %v1153
    %v1254 = vunpack.c.l.b16 %v1154
    %v1255 = vunpack.c.l.b16 %v1155
    %v1256 = vunpack.c.l.b16 %v1156
    %v1257 = vunpack.c.l.b16 %v1157
    %v1258 = vunpack.c.l.b16 %v1158
    %v1259 = vunpack.c.l.b16 %v1159
    %v1260 = vunpack.c.l.b16 %v1160
    %v1261 = vunpack.c.l.b16 %v1161
    %v1262 = vunpack.c.l.b16 %v1162
    %v1263 = vunpack.c.l.b16 %v1163
    %v1264 = vunpack.c.l.b16 %v1164
    %v1265 = vunpack.c.l.b16 %v1165
    %v1266 = vunpack.c.l.b16 %v1166
    %v1267 = vunpack.c.l.b16 %v1167
    %v1268 = vunpack.c.l.b16 %v1168
    %v1269 = vunpack.c.l.b16 %v1169
    %v1270 = vunpack.c.l.b16 %v1170
    %v1271 = vunpack.c.l.b16 %v1171
    %v1272 = vunpack.c.l.b16 %v1172
    %v1273 = vunpack.c.l.b16 %v1173
    %v1274 = vpack.c.b16 %v1227, %v1226
    %v1275 = vpack.c.b16 %v1229, %v1228
    %v1276 = vpack.c.b16 %v1231, %v1230
    %v1277 = vpack.c.b16 %v1233, %v1232
    %v1278 = vpack.c.b16 %v1235, %v1234
    %v1279 = vpack.c.b16 %v1237, %v1236
    %v1280 = vpack.c.b16 %v1239, %v1238
    %v1281 = vpack.c.b16 %v1241, %v1240
    %v1282 = vpack.c.b16 %v1243, %v1242
    %v1283 = vpack.c.b16 %v1245, %v1244
    %v1284 = vpack.c.b16 %v1247, %v1246
    %v1285 = vpack.c.b16 %v1249, %v1248
    %v1286 = vpack.c.b16 %v1251, %v1250
    %v1287 = vpack.c.b16 %v1253, %v1252
    %v1288 = vpack.c.b16 %v1255, %v1254
    %v1289 = vpack.c.b16 %v1257, %v1256
    %v1290 = vpack.c.b16 %v1259, %v1258
    %v1291 = vpack.c.b16 %v1261, %v1260
    %v1292 = vpack.c.b16 %v1263, %v1262
    %v1293 = vpack.c.b16 %v1265, %v1264
    %v1294 = vpack.c.b16 %v1267, %v1266
    %v1295 = vpack.c.b16 %v1269, %v1268
    %v1296 = vpack.c.b16 %v1271, %v1270
    %v1297 = vpack.c.b16 %v1273, %v1272
    %1322 = vmatprep.subr.bf16.mxu0 0
    %1323 = vmatpush1.bf16.msra.mxu0 %v1274
    %1324 = vmatprep.subr.bf16.mxu0 0
    %1325 = vmatpush1.bf16.msra.mxu0 %v1275
    %1326 = vmatprep.subr.bf16.mxu0 0
    %1327 = vmatpush1.bf16.msra.mxu0 %v1276
    %1328 = vmatprep.subr.bf16.mxu0 0
    %1329 = vmatpush1.bf16.msra.mxu0 %v1277
    %1330 = vmatprep.subr.bf16.mxu0 0
    %1331 = vmatpush1.bf16.msra.mxu0 %v1278
    %1332 = vmatprep.subr.bf16.mxu0 0
    %1333 = vmatpush1.bf16.msra.mxu0 %v1279
    %1334 = vmatprep.subr.bf16.mxu0 0
    %1335 = vmatpush1.bf16.msra.mxu0 %v1280
    %1336 = vmatprep.subr.bf16.mxu0 0
    %1337 = vmatpush1.bf16.msra.mxu0 %v1281
    %1338 = vmatprep.subr.bf16.mxu0 0
    %1339 = vmatpush1.bf16.msra.mxu0 %v1282
    %1340 = vmatprep.subr.bf16.mxu0 0
    %1341 = vmatpush1.bf16.msra.mxu0 %v1283
    %1342 = vmatprep.subr.bf16.mxu0 0
    %1343 = vmatpush1.bf16.msra.mxu0 %v1284
    %1344 = vmatprep.subr.bf16.mxu0 0
    %1345 = vmatpush1.bf16.msra.mxu0 %v1285
    %1346 = vmatprep.subr.bf16.mxu0 0
    %1347 = vmatpush1.bf16.msra.mxu0 %v1286
    %1348 = vmatprep.subr.bf16.mxu0 0
    %1349 = vmatpush1.bf16.msra.mxu0 %v1287
    %1350 = vmatprep.subr.bf16.mxu0 0
    %1351 = vmatpush1.bf16.msra.mxu0 %v1288
    %1352 = vmatprep.subr.bf16.mxu0 0
    %1353 = vmatpush1.bf16.msra.mxu0 %v1289
    %1354 = vmatprep.mubr.bf16.mxu0 %v1121
    %1355 = vmatmul.mubr.bf16.gmra.mrb[0].mxu0 %v1120
    %v1356 = vpop.f32.mrb[0].mxu0
    %v1357 = vadd.f32 %v1177, %v1356
    %v1358 = vpop.f32.mrb[0].mxu0
    %v1359 = vpop.f32.mrb[0].mxu0
    %v1360 = vadd.f32 %v1177, %v1359
    %v1361 = vpop.f32.mrb[0].mxu0
    %1362 = vmatprep.mubr.bf16.mxu0 %v1124
    %1363 = vmatmul.mubr.bf16.gmra.mrb[0].mxu0 %v1123
    %v1364 = vpop.f32.mrb[0].mxu0
    %v1365 = vadd.f32 %v1177, %v1364
    %v1366 = vpop.f32.mrb[0].mxu0
    %v1367 = vpop.f32.mrb[0].mxu0
    %v1368 = vadd.f32 %v1177, %v1367
    %v1369 = vpop.f32.mrb[0].mxu0
    %1370 = vdwg.mxu0
    %1371 = vmatprep.subr.bf16.mxu0 0
    %1372 = vmatpush1.bf16.msra.mxu0 %v1290
    %1373 = vmatprep.subr.bf16.mxu0 0
    %1374 = vmatpush1.bf16.msra.mxu0 %v1291
    %1375 = vmatprep.subr.bf16.mxu0 0
    %1376 = vmatpush1.bf16.msra.mxu0 %v1292
    %1377 = vmatprep.subr.bf16.mxu0 0
    %1378 = vmatpush1.bf16.msra.mxu0 %v1293
    %1379 = vmatprep.subr.bf16.mxu0 0
    %1380 = vmatpush1.bf16.msra.mxu0 %v1294
    %1381 = vmatprep.subr.bf16.mxu0 0
    %1382 = vmatpush1.bf16.msra.mxu0 %v1295
    %1383 = vmatprep.subr.bf16.mxu0 0
    %1384 = vmatpush1.bf16.msra.mxu0 %v1296
    %1385 = vmatprep.subr.bf16.mxu0 0
    %1386 = vmatpush1.bf16.msra.mxu0 %v1297
    %1387 = vmatprep.subr.bf16.mxu0 0
    %1388 = vmatpush1.bf16.msra.mxu0 0
    %1389 = vmatprep.subr.bf16.mxu0 0
    %1390 = vmatpush1.bf16.msra.mxu0 0
    %1391 = vmatprep.subr.bf16.mxu0 0
    %1392 = vmatpush1.bf16.msra.mxu0 0
    %1393 = vmatprep.subr.bf16.mxu0 0
    %1394 = vmatpush1.bf16.msra.mxu0 0
    %1395 = vmatprep.subr.bf16.mxu0 0
    %1396 = vmatpush1.bf16.msra.mxu0 0
    %1397 = vmatprep.subr.bf16.mxu0 0
    %1398 = vmatpush1.bf16.msra.mxu0 0
    %1399 = vmatprep.subr.bf16.mxu0 0
    %1400 = vmatpush1.bf16.msra.mxu0 0
    %1401 = vmatprep.subr.bf16.mxu0 0
    %1402 = vmatpush1.bf16.msra.mxu0 0
    %1403 = vmatprep.mubr.bf16.mxu0 0
    %1404 = vmatmul.mubr.bf16.gmra.mrb[0].mxu0 %v1122
    %v1405 = vpop.f32.mrb[0].mxu0
    %v1406 = vadd.f32 %v1357, %v1405
    %v1407 = vpop.f32.mrb[0].mxu0
    %v1408 = vpop.f32.mrb[0].mxu0
    %v1409 = vadd.f32 %v1360, %v1408
    %v1410 = vpop.f32.mrb[0].mxu0
    %1411 = vmatprep.mubr.bf16.mxu0 0
    %1412 = vmatmul.mubr.bf16.gmra.mrb[0].mxu0 %v1125
    %v1413 = vpop.f32.mrb[0].mxu0
    %v1414 = vadd.f32 %v1365, %v1413
    %v1415 = vpop.f32.mrb[0].mxu0
    %v1416 = vpop.f32.mrb[0].mxu0
    %v1417 = vadd.f32 %v1368, %v1416
    %v1418 = vpop.f32.mrb[0].mxu0
    %1419 = vdwg.mxu0
    %v1420 = vmax.f32 %v1406, 0.0
    %v1421 = vmax.f32 %v1409, 0.0
    %v1422 = vmax.f32 %v1414, 0.0
    %v1423 = vmax.f32 %v1417, 0.0
    %v1424 = vld [vmem:[#allocation2 + $0x404] sm:$0x1]
    %v1425 = vpack.c.bf16 %v1421, %v1420
    %v1426 = vpack.c.bf16 %v1423, %v1422
    %vm1427 = vcmask 261120
    %v1429 = vsel %vm1427, %v1424, 0
    %1431 = vmatprep.subr.bf16.mxu0 0
    %1432 = vmatpush1.bf16.msra.mxu0 %v1425
    %1433 = vmatprep.subr.bf16.mxu0 0
    %1434 = vmatpush1.bf16.msra.mxu0 %v1426
    %1435 = vmatprep.subr.bf16.mxu0 0
    %1436 = vmatpush1.bf16.msra.mxu0 0
    %1437 = vmatprep.subr.bf16.mxu0 0
    %1438 = vmatpush1.bf16.msra.mxu0 0
    %1439 = vmatprep.subr.bf16.mxu0 0
    %1440 = vmatpush1.bf16.msra.mxu0 0
    %1441 = vmatprep.subr.bf16.mxu0 0
    %1442 = vmatpush1.bf16.msra.mxu0 0
    %1443 = vmatprep.subr.bf16.mxu0 0
    %1444 = vmatpush1.bf16.msra.mxu0 0
    %1445 = vmatprep.subr.bf16.mxu0 0
    %1446 = vmatpush1.bf16.msra.mxu0 0
    %1447 = vmatprep.subr.bf16.mxu0 0
    %1448 = vmatpush1.bf16.msra.mxu0 0
    %1449 = vmatprep.subr.bf16.mxu0 0
    %1450 = vmatpush1.bf16.msra.mxu0 0
    %1451 = vmatprep.subr.bf16.mxu0 0
    %1452 = vmatpush1.bf16.msra.mxu0 0
    %1453 = vmatprep.subr.bf16.mxu0 0
    %1454 = vmatpush1.bf16.msra.mxu0 0
    %1455 = vmatprep.subr.bf16.mxu0 0
    %1456 = vmatpush1.bf16.msra.mxu0 0
    %1457 = vmatprep.subr.bf16.mxu0 0
    %1458 = vmatpush1.bf16.msra.mxu0 0
    %1459 = vmatprep.subr.bf16.mxu0 0
    %1460 = vmatpush1.bf16.msra.mxu0 0
    %1461 = vmatprep.subr.bf16.mxu0 0
    %1462 = vmatpush1.bf16.msra.mxu0 0
    %1463 = vmatprep.mubr.bf16.mxu0 0
    %1464 = vmatmul.mubr.bf16.gmra.mrb[0].mxu0 %v1429
    %v1465 = vpop.f32.mrb[0].mxu0
    %v1466 = vadd.f32 0.0, %v1465
    %v1467 = vpop.f32.mrb[0].mxu0
    %v1468 = vpop.f32.mrb[0].mxu0
    %v1469 = vpop.f32.mrb[0].mxu0
    %1470 = vdwg.mxu0
    %v1471 = vmul.f32 %v1466, 0.1
    %v1472 = vpack.c.bf16 %v389, %v389
    %v1473 = vpack.c.bf16 %v1471, %v1471
    %v1474 = vpack.c.bf16 %v47, %v47
    %v1475 = vld [vmem:[#allocation2 + $0x300] sm:$0xf]
    %v1476 = vld [vmem:[#allocation2 + $0x304] sm:$0xf]
    %v1477 = vld [vmem:[#allocation2 + $0x308] sm:$0xf]
    %v1478 = vld [vmem:[#allocation2 + $0x30c] sm:$0xf]
    %v1479 = vld [vmem:[#allocation2 + $0x310] sm:$0xf]
    %v1480 = vld [vmem:[#allocation2 + $0x314] sm:$0xf]
    %v1481 = vld [vmem:[#allocation2 + $0x318] sm:$0xf]
    %v1482 = vld [vmem:[#allocation2 + $0x31c] sm:$0xf]
    %v1483 = vld [vmem:[#allocation2 + $0x320] sm:$0xf]
    %v1484 = vld [vmem:[#allocation2 + $0x324] sm:$0xf]
    %v1485 = vld [vmem:[#allocation2 + $0x328] sm:$0xf]
    %v1486 = vld [vmem:[#allocation2 + $0x32c] sm:$0xf]
    %v1487 = vld [vmem:[#allocation2 + $0x330] sm:$0xf]
    %v1488 = vld [vmem:[#allocation2 + $0x334] sm:$0xf]
    %v1489 = vld [vmem:[#allocation2 + $0x338] sm:$0xf]
    %v1490 = vld [vmem:[#allocation2 + $0x33c] sm:$0xf]
    %v1491 = vld [vmem:[#allocation2 + $0x340] sm:$0xf]
    %v1492 = vld [vmem:[#allocation2 + $0x344] sm:$0xf]
    %v1493 = vld [vmem:[#allocation2 + $0x348] sm:$0xf]
    %v1494 = vld [vmem:[#allocation2 + $0x34c] sm:$0xf]
    %v1495 = vld [vmem:[#allocation2 + $0x350] sm:$0xf]
    %v1496 = vld [vmem:[#allocation2 + $0x354] sm:$0xf]
    %v1497 = vld [vmem:[#allocation2 + $0x358] sm:$0xf]
    %v1498 = vld [vmem:[#allocation2 + $0x35c] sm:$0xf]
    %v1499 = vld [vmem:[#allocation2 + $0x360] sm:$0xf]
    %v1500 = vld [vmem:[#allocation2 + $0x364] sm:$0xf]
    %v1501 = vld [vmem:[#allocation2 + $0x368] sm:$0xf]
    %v1502 = vld [vmem:[#allocation2 + $0x36c] sm:$0xf]
    %v1503 = vld [vmem:[#allocation2 + $0x370] sm:$0xf]
    %v1504 = vld [vmem:[#allocation2 + $0x374] sm:$0xf]
    %v1505 = vld [vmem:[#allocation2 + $0x378] sm:$0xf]
    %v1506 = vld [vmem:[#allocation2 + $0x37c] sm:$0xf]
    %v1507 = vld [vmem:[#allocation2 + $0x380] sm:$0xf]
    %v1508 = vld [vmem:[#allocation2 + $0x384] sm:$0xf]
    %v1509 = vld [vmem:[#allocation2 + $0x388] sm:$0xf]
    %v1510 = vld [vmem:[#allocation2 + $0x38c] sm:$0xf]
    %v1511 = vld [vmem:[#allocation2 + $0x390] sm:$0xf]
    %v1512 = vld [vmem:[#allocation2 + $0x394] sm:$0xf]
    %v1513 = vld [vmem:[#allocation2 + $0x398] sm:$0xf]
    %v1514 = vld [vmem:[#allocation2 + $0x39c] sm:$0xf]
    %v1515 = vld [vmem:[#allocation2 + $0x3a0] sm:$0xf]
    %v1516 = vld [vmem:[#allocation2 + $0x3a4] sm:$0xf]
    %v1517 = vld [vmem:[#allocation2 + $0x3a8] sm:$0xf]
    %v1518 = vld [vmem:[#allocation2 + $0x3ac] sm:$0xf]
    %v1519 = vld [vmem:[#allocation2 + $0x3b0] sm:$0xf]
    %v1520 = vld [vmem:[#allocation2 + $0x3b4] sm:$0xf]
    %v1521 = vld [vmem:[#allocation2 + $0x3b8] sm:$0xf]
    %v1522 = vld [vmem:[#allocation2 + $0x3bc] sm:$0xf]
    %v1523 = vlaneseq
    %v1524 = vshrl.u32 %v1523, 7
    %v1525 = vsub.s32 0, %v1524
    %v1526 = vrot.slane %v35, %v1525
    %v1575 = vunpack.c.l.b16 %v1475
    %v1576 = vunpack.c.l.b16 %v1476
    %v1577 = vunpack.c.l.b16 %v1477
    %v1578 = vunpack.c.l.b16 %v1478
    %v1579 = vunpack.c.l.b16 %v1479
    %v1580 = vunpack.c.l.b16 %v1480
    %v1581 = vunpack.c.l.b16 %v1481
    %v1582 = vunpack.c.l.b16 %v1482
    %v1583 = vunpack.c.l.b16 %v1483
    %v1584 = vunpack.c.l.b16 %v1484
    %v1585 = vunpack.c.l.b16 %v1485
    %v1586 = vunpack.c.l.b16 %v1486
    %v1587 = vunpack.c.l.b16 %v1487
    %v1588 = vunpack.c.l.b16 %v1488
    %v1589 = vunpack.c.l.b16 %v1489
    %v1590 = vunpack.c.l.b16 %v1490
    %v1591 = vunpack.c.l.b16 %v1491
    %v1592 = vunpack.c.l.b16 %v1492
    %v1593 = vunpack.c.l.b16 %v1493
    %v1594 = vunpack.c.l.b16 %v1494
    %v1595 = vunpack.c.l.b16 %v1495
    %v1596 = vunpack.c.l.b16 %v1496
    %v1597 = vunpack.c.l.b16 %v1497
    %v1598 = vunpack.c.l.b16 %v1498
    %v1599 = vunpack.c.l.b16 %v1499
    %v1600 = vunpack.c.l.b16 %v1500
    %v1601 = vunpack.c.l.b16 %v1501
    %v1602 = vunpack.c.l.b16 %v1502
    %v1603 = vunpack.c.l.b16 %v1503
    %v1604 = vunpack.c.l.b16 %v1504
    %v1605 = vunpack.c.l.b16 %v1505
    %v1606 = vunpack.c.l.b16 %v1506
    %v1607 = vunpack.c.l.b16 %v1507
    %v1608 = vunpack.c.l.b16 %v1508
    %v1609 = vunpack.c.l.b16 %v1509
    %v1610 = vunpack.c.l.b16 %v1510
    %v1611 = vunpack.c.l.b16 %v1511
    %v1612 = vunpack.c.l.b16 %v1512
    %v1613 = vunpack.c.l.b16 %v1513
    %v1614 = vunpack.c.l.b16 %v1514
    %v1615 = vunpack.c.l.b16 %v1515
    %v1616 = vunpack.c.l.b16 %v1516
    %v1617 = vunpack.c.l.b16 %v1517
    %v1618 = vunpack.c.l.b16 %v1518
    %v1619 = vunpack.c.l.b16 %v1519
    %v1620 = vunpack.c.l.b16 %v1520
    %v1621 = vunpack.c.l.b16 %v1521
    %v1622 = vunpack.c.l.b16 %v1522
    %v1623 = vpack.c.b16 %v1576, %v1575
    %v1624 = vpack.c.b16 %v1578, %v1577
    %v1625 = vpack.c.b16 %v1580, %v1579
    %v1626 = vpack.c.b16 %v1582, %v1581
    %v1627 = vpack.c.b16 %v1584, %v1583
    %v1628 = vpack.c.b16 %v1586, %v1585
    %v1629 = vpack.c.b16 %v1588, %v1587
    %v1630 = vpack.c.b16 %v1590, %v1589
    %v1631 = vpack.c.b16 %v1592, %v1591
    %v1632 = vpack.c.b16 %v1594, %v1593
    %v1633 = vpack.c.b16 %v1596, %v1595
    %v1634 = vpack.c.b16 %v1598, %v1597
    %v1635 = vpack.c.b16 %v1600, %v1599
    %v1636 = vpack.c.b16 %v1602, %v1601
    %v1637 = vpack.c.b16 %v1604, %v1603
    %v1638 = vpack.c.b16 %v1606, %v1605
    %v1639 = vpack.c.b16 %v1608, %v1607
    %v1640 = vpack.c.b16 %v1610, %v1609
    %v1641 = vpack.c.b16 %v1612, %v1611
    %v1642 = vpack.c.b16 %v1614, %v1613
    %v1643 = vpack.c.b16 %v1616, %v1615
    %v1644 = vpack.c.b16 %v1618, %v1617
    %v1645 = vpack.c.b16 %v1620, %v1619
    %v1646 = vpack.c.b16 %v1622, %v1621
    %1671 = vmatprep.subr.bf16.mxu0 0
    %1672 = vmatpush1.bf16.msra.mxu0 %v1623
    %1673 = vmatprep.subr.bf16.mxu0 0
    %1674 = vmatpush1.bf16.msra.mxu0 %v1624
    %1675 = vmatprep.subr.bf16.mxu0 0
    %1676 = vmatpush1.bf16.msra.mxu0 %v1625
    %1677 = vmatprep.subr.bf16.mxu0 0
    %1678 = vmatpush1.bf16.msra.mxu0 %v1626
    %1679 = vmatprep.subr.bf16.mxu0 0
    %1680 = vmatpush1.bf16.msra.mxu0 %v1627
    %1681 = vmatprep.subr.bf16.mxu0 0
    %1682 = vmatpush1.bf16.msra.mxu0 %v1628
    %1683 = vmatprep.subr.bf16.mxu0 0
    %1684 = vmatpush1.bf16.msra.mxu0 %v1629
    %1685 = vmatprep.subr.bf16.mxu0 0
    %1686 = vmatpush1.bf16.msra.mxu0 %v1630
    %1687 = vmatprep.subr.bf16.mxu0 0
    %1688 = vmatpush1.bf16.msra.mxu0 %v1631
    %1689 = vmatprep.subr.bf16.mxu0 0
    %1690 = vmatpush1.bf16.msra.mxu0 %v1632
    %1691 = vmatprep.subr.bf16.mxu0 0
    %1692 = vmatpush1.bf16.msra.mxu0 %v1633
    %1693 = vmatprep.subr.bf16.mxu0 0
    %1694 = vmatpush1.bf16.msra.mxu0 %v1634
    %1695 = vmatprep.subr.bf16.mxu0 0
    %1696 = vmatpush1.bf16.msra.mxu0 %v1635
    %1697 = vmatprep.subr.bf16.mxu0 0
    %1698 = vmatpush1.bf16.msra.mxu0 %v1636
    %1699 = vmatprep.subr.bf16.mxu0 0
    %1700 = vmatpush1.bf16.msra.mxu0 %v1637
    %1701 = vmatprep.subr.bf16.mxu0 0
    %1702 = vmatpush1.bf16.msra.mxu0 %v1638
    %1703 = vmatprep.mubr.bf16.mxu0 %v1473
    %1704 = vmatmul.mubr.bf16.gmra.mrb[0].mxu0 %v1472
    %v1705 = vpop.f32.mrb[0].mxu0
    %v1706 = vadd.f32 %v1526, %v1705
    %v1707 = vpop.f32.mrb[0].mxu0
    %v1708 = vpop.f32.mrb[0].mxu0
    %v1709 = vpop.f32.mrb[0].mxu0
    %1710 = vdwg.mxu0
    %1711 = vmatprep.subr.bf16.mxu0 0
    %1712 = vmatpush1.bf16.msra.mxu0 %v1639
    %1713 = vmatprep.subr.bf16.mxu0 0
    %1714 = vmatpush1.bf16.msra.mxu0 %v1640
    %1715 = vmatprep.subr.bf16.mxu0 0
    %1716 = vmatpush1.bf16.msra.mxu0 %v1641
    %1717 = vmatprep.subr.bf16.mxu0 0
    %1718 = vmatpush1.bf16.msra.mxu0 %v1642
    %1719 = vmatprep.subr.bf16.mxu0 0
    %1720 = vmatpush1.bf16.msra.mxu0 %v1643
    %1721 = vmatprep.subr.bf16.mxu0 0
    %1722 = vmatpush1.bf16.msra.mxu0 %v1644
    %1723 = vmatprep.subr.bf16.mxu0 0
    %1724 = vmatpush1.bf16.msra.mxu0 %v1645
    %1725 = vmatprep.subr.bf16.mxu0 0
    %1726 = vmatpush1.bf16.msra.mxu0 %v1646
    %1727 = vmatprep.subr.bf16.mxu0 0
    %1728 = vmatpush1.bf16.msra.mxu0 0
    %1729 = vmatprep.subr.bf16.mxu0 0
    %1730 = vmatpush1.bf16.msra.mxu0 0
    %1731 = vmatprep.subr.bf16.mxu0 0
    %1732 = vmatpush1.bf16.msra.mxu0 0
    %1733 = vmatprep.subr.bf16.mxu0 0
    %1734 = vmatpush1.bf16.msra.mxu0 0
    %1735 = vmatprep.subr.bf16.mxu0 0
    %1736 = vmatpush1.bf16.msra.mxu0 0
    %1737 = vmatprep.subr.bf16.mxu0 0
    %1738 = vmatpush1.bf16.msra.mxu0 0
    %1739 = vmatprep.subr.bf16.mxu0 0
    %1740 = vmatpush1.bf16.msra.mxu0 0
    %1741 = vmatprep.subr.bf16.mxu0 0
    %1742 = vmatpush1.bf16.msra.mxu0 0
    %1743 = vmatprep.mubr.bf16.mxu0 0
    %1744 = vmatmul.mubr.bf16.gmra.mrb[0].mxu0 %v1474
    %v1745 = vpop.f32.mrb[0].mxu0
    %v1746 = vadd.f32 %v1706, %v1745
    %v1747 = vpop.f32.mrb[0].mxu0
    %v1748 = vpop.f32.mrb[0].mxu0
    %v1749 = vpop.f32.mrb[0].mxu0
    %1750 = vdwg.mxu0
    %v1751 = vmax.f32 %v1746, 0.0
    %v1752 = vpack.c.bf16 %v1751, %v1751
    %v1753 = vld [vmem:[#allocation2 + $0x3c0] sm:$0xf]
    %v1754 = vld [vmem:[#allocation2 + $0x3c4] sm:$0xf]
    %v1755 = vld [vmem:[#allocation2 + $0x3c8] sm:$0xf]
    %v1756 = vld [vmem:[#allocation2 + $0x3cc] sm:$0xf]
    %v1757 = vld [vmem:[#allocation2 + $0x3d0] sm:$0xf]
    %v1758 = vld [vmem:[#allocation2 + $0x3d4] sm:$0xf]
    %v1759 = vld [vmem:[#allocation2 + $0x3d8] sm:$0xf]
    %v1760 = vld [vmem:[#allocation2 + $0x3dc] sm:$0xf]
    %v1761 = vld [vmem:[#allocation2 + $0x3e0] sm:$0xf]
    %v1762 = vld [vmem:[#allocation2 + $0x3e4] sm:$0xf]
    %v1763 = vld [vmem:[#allocation2 + $0x3e8] sm:$0xf]
    %v1764 = vld [vmem:[#allocation2 + $0x3ec] sm:$0xf]
    %v1765 = vld [vmem:[#allocation2 + $0x3f0] sm:$0xf]
    %v1766 = vld [vmem:[#allocation2 + $0x3f4] sm:$0xf]
    %v1767 = vld [vmem:[#allocation2 + $0x3f8] sm:$0xf]
    %v1768 = vld [vmem:[#allocation2 + $0x3fc] sm:$0xf]
    %v1769 = vlaneseq
    %v1770 = vshrl.u32 %v1769, 7
    %v1771 = vsub.s32 0, %v1770
    %v1772 = vrot.slane %v36, %v1771
    %v1789 = vunpack.c.l.b16 %v1753
    %v1790 = vunpack.c.l.b16 %v1754
    %v1791 = vunpack.c.l.b16 %v1755
    %v1792 = vunpack.c.l.b16 %v1756
    %v1793 = vunpack.c.l.b16 %v1757
    %v1794 = vunpack.c.l.b16 %v1758
    %v1795 = vunpack.c.l.b16 %v1759
    %v1796 = vunpack.c.l.b16 %v1760
    %v1797 = vunpack.c.l.b16 %v1761
    %v1798 = vunpack.c.l.b16 %v1762
    %v1799 = vunpack.c.l.b16 %v1763
    %v1800 = vunpack.c.l.b16 %v1764
    %v1801 = vunpack.c.l.b16 %v1765
    %v1802 = vunpack.c.l.b16 %v1766
    %v1803 = vunpack.c.l.b16 %v1767
    %v1804 = vunpack.c.l.b16 %v1768
    %v1805 = vpack.c.b16 %v1790, %v1789
    %v1806 = vpack.c.b16 %v1792, %v1791
    %v1807 = vpack.c.b16 %v1794, %v1793
    %v1808 = vpack.c.b16 %v1796, %v1795
    %v1809 = vpack.c.b16 %v1798, %v1797
    %v1810 = vpack.c.b16 %v1800, %v1799
    %v1811 = vpack.c.b16 %v1802, %v1801
    %v1812 = vpack.c.b16 %v1804, %v1803
    %1821 = vmatprep.subr.bf16.mxu0 0
    %1822 = vmatpush1.bf16.msra.mxu0 %v1805
    %1823 = vmatprep.subr.bf16.mxu0 0
    %1824 = vmatpush1.bf16.msra.mxu0 %v1806
    %1825 = vmatprep.subr.bf16.mxu0 0
    %1826 = vmatpush1.bf16.msra.mxu0 %v1807
    %1827 = vmatprep.subr.bf16.mxu0 0
    %1828 = vmatpush1.bf16.msra.mxu0 %v1808
    %1829 = vmatprep.subr.bf16.mxu0 0
    %1830 = vmatpush1.bf16.msra.mxu0 %v1809
    %1831 = vmatprep.subr.bf16.mxu0 0
    %1832 = vmatpush1.bf16.msra.mxu0 %v1810
    %1833 = vmatprep.subr.bf16.mxu0 0
    %1834 = vmatpush1.bf16.msra.mxu0 %v1811
    %1835 = vmatprep.subr.bf16.mxu0 0
    %1836 = vmatpush1.bf16.msra.mxu0 %v1812
    %1837 = vmatprep.subr.bf16.mxu0 0
    %1838 = vmatpush1.bf16.msra.mxu0 0
    %1839 = vmatprep.subr.bf16.mxu0 0
    %1840 = vmatpush1.bf16.msra.mxu0 0
    %1841 = vmatprep.subr.bf16.mxu0 0
    %1842 = vmatpush1.bf16.msra.mxu0 0
    %1843 = vmatprep.subr.bf16.mxu0 0
    %1844 = vmatpush1.bf16.msra.mxu0 0
    %1845 = vmatprep.subr.bf16.mxu0 0
    %1846 = vmatpush1.bf16.msra.mxu0 0
    %1847 = vmatprep.subr.bf16.mxu0 0
    %1848 = vmatpush1.bf16.msra.mxu0 0
    %1849 = vmatprep.subr.bf16.mxu0 0
    %1850 = vmatpush1.bf16.msra.mxu0 0
    %1851 = vmatprep.subr.bf16.mxu0 0
    %1852 = vmatpush1.bf16.msra.mxu0 0
    %1853 = vmatprep.mubr.bf16.mxu0 0
    %1854 = vmatmul.mubr.bf16.gmra.mrb[0].mxu0 %v1752
    %v1855 = vpop.f32.mrb[0].mxu0
    %v1856 = vadd.f32 %v1772, %v1855
    %v1857 = vpop.f32.mrb[0].mxu0
    %v1858 = vpop.f32.mrb[0].mxu0
    %v1859 = vpop.f32.mrb[0].mxu0
    %1860 = vdwg.mxu0
    %1861 = vst [vmem:[%s3] sm:$0x3] %v1856
    // Predicated region
    $region18: #{forward.1} parent=1 // pred_check
      _
    $region19: #{forward.1} parent=1 // pred_check_branch
      %1863 = sbr.rel (0) target = $region21
    $region20: #{forward.1} parent=1 // pred_region
      _
    $region21: #{forward.1} parent=1 // pred_fallthru
      _
    // Predicated region
    $region22: #{forward.1} parent=1 // pred_check
      _
    $region23: #{forward.1} parent=1 // pred_check_branch
      %1865 = sbr.rel (0) target = $region25
    $region24: #{forward.1} parent=1 // pred_region
      _
    $region25: #{forward.1} parent=1 // pred_fallthru
      _
    %1866 = vsyncpa [#allocation3], 1

</llo_original>
